<compile_context>
chip_gen: v5e
topology: v5e:2x2
jax: 0.10.0
libtpu: 0.0.40
codegen_flags: <defaults>
</compile_context>

<pallas_src>
import functools

import jax
import jax.numpy as jnp
from jax.experimental import pallas as pl
from jax.experimental.pallas import tpu as pltpu

ACT_BIT = 4                      # act_bit=4 > 3  ->  ReLU6 path + STE(bit=4)
BN_EPS = 1e-5                    # PyTorch BatchNorm2d default eps
_VMEM_LIMIT = 32 * 1024 * 1024   # raise scoped VMEM everywhere (v5e default 16M)
_VMEM_BUDGET = 24 * 1024 * 1024  # per-call tile budget (double-buffer included)


# ---------------------------------------------------------------------------
# In-kernel helpers
# ---------------------------------------------------------------------------

def _pack_partials(row0, row1=None, nrows=8):
    """Place (1, C) row0 / row1 into sublane rows 0 / 1 of an (nrows, C) tile,
    zeros elsewhere.  Pure VPU ops (iota + where) — no concat / sliced stores."""
    c = row0.shape[-1]
    rows = jax.lax.broadcasted_iota(jnp.int32, (nrows, c), 0)
    out = jnp.where(rows == 0, jnp.broadcast_to(row0, (nrows, c)), 0.0)
    if row1 is not None:
        out = jnp.where(rows == 1, jnp.broadcast_to(row1, (nrows, c)), out)
    return out


# ---------------------------------------------------------------------------
# Pallas kernels
# ---------------------------------------------------------------------------

def _conv_stats_kernel(p_ref, w_ref, conv_ref, stats_ref):
    """Pass A: conv tile = patches @ weights (MXU, bf16 in / f32 acc) plus
    per-tile partial BN statistics (per-channel sum and sum-of-squares)."""
    conv = jnp.dot(p_ref[...], w_ref[...], preferred_element_type=jnp.float32)
    conv_ref[...] = conv
    csum = jnp.sum(conv, axis=0, keepdims=True)          # (1, C)
    csq = jnp.sum(conv * conv, axis=0, keepdims=True)    # (1, C)
    stats_ref[...] = _pack_partials(csum, csq)


def _bn_act_kernel(conv_ref, scale_ref, bias_ref, y_ref, mx_ref):
    """Pass B (no residual): y = clip(conv*scale + bias, 0, 6); partial max."""
    y = jnp.clip(conv_ref[...] * scale_ref[...] + bias_ref[...], 0.0, 6.0)
    y_ref[...] = y
    mx_ref[...] = _pack_partials(jnp.max(y, axis=0, keepdims=True))


def _bn_act_res_kernel(conv_ref, scale_ref, bias_ref, res_ref, y_ref, mx_ref):
    """Pass B (residual added before ReLU6)."""
    y = conv_ref[...] * scale_ref[...] + bias_ref[...] + res_ref[...]
    y = jnp.clip(y, 0.0, 6.0)
    y_ref[...] = y
    mx_ref[...] = _pack_partials(jnp.max(y, axis=0, keepdims=True))


def _quant_kernel(y_ref, s_ref, q_ref):
    """Pass C: STE forward.  y >= 0 after ReLU6 so abs/sign are dropped;
    per-element work is mul + round + mul, reciprocal on the EUP slot."""
    step = float(2 ** ACT_BIT - 1)
    s = s_ref[...]                                  # (1, 1)
    safe = jnp.where(s == 0.0, 1.0, s)
    inv = pl.reciprocal(safe, approx=True)
    r = jnp.round(y_ref[...] * (step * inv)) * (1.0 / step)
    q_ref[...] = s * r                              # s == 0 -> r == 0 -> q == 0


# ---------------------------------------------------------------------------
# Host-side helpers (tile sizing, layout glue)
# ---------------------------------------------------------------------------

def _pick_rows(m, row_bytes, fixed_bytes, target):
    """Largest row tile <= target that is a multiple of 8, divides m, and whose
    double-buffered footprint fits the VMEM budget; falls back to the full m
    (a block equal to the array dim is always legal)."""
    cand = (min(target, m) // 8) * 8
    while cand >= 8:
        if m % cand == 0 and cand * row_bytes + fixed_bytes <= _VMEM_BUDGET:
            return cand
        cand -= 8
    return m


def _fold_factor(m, c):
    """Fold f M-rows into the lane axis so elementwise passes run lane-dense
    (>=128 lanes when possible) without padding channels."""
    if c >= 128:
        return 1
    f = max(1, 128 // c)
    while f > 1 and m % f != 0:
        f -= 1
    return f


def _compiler_params():
    return pltpu.CompilerParams(dimension_semantics=("parallel",),
                                vmem_limit_bytes=_VMEM_LIMIT)


def _im2col(x_nhwc):
    """3x3, stride 1, padding 1 patches -> (N*H*W, 9*C). Plain-JAX glue."""
    n, h, w, c = x_nhwc.shape
    xp = jnp.pad(x_nhwc, ((0, 0), (1, 1), (1, 1), (0, 0)))
    cols = [xp[:, kh:kh + h, kw:kw + w, :] for kh in range(3) for kw in range(3)]
    return jnp.concatenate(cols, axis=-1).reshape(n * h * w, 9 * c)


def _conv_weight_to_matmul(w_oihw):
    """(Cout, Cin, 3, 3) -> (9*Cin, Cout), tap order matching _im2col."""
    cout = w_oihw.shape[0]
    return jnp.transpose(w_oihw, (2, 3, 1, 0)).reshape(-1, cout)


# ---------------------------------------------------------------------------
# pallas_call wrappers
# ---------------------------------------------------------------------------

def _conv_stats(patches, wmat, block_rows):
    m, k = patches.shape
    c = wmat.shape[1]
    row_bytes = 2 * (k * 2 + c * 4)            # bf16 patches + f32 conv, x2 bufs
    fixed = 2 * (k * c * 2 + 8 * c * 4)        # weights + stats blocks
    tm = _pick_rows(m, row_bytes, fixed, block_rows)
    grid_m = m // tm

    conv, stats = pl.pallas_call(
        _conv_stats_kernel,
        out_shape=(jax.ShapeDtypeStruct((m, c), jnp.float32),
                   jax.ShapeDtypeStruct((grid_m * 8, c), jnp.float32)),
        grid=(grid_m,),
        in_specs=[pl.BlockSpec((tm, k), lambda i: (i, 0)),
                  pl.BlockSpec((k, c), lambda i: (0, 0))],
        out_specs=(pl.BlockSpec((tm, c), lambda i: (i, 0)),
                   pl.BlockSpec((8, c), lambda i: (i, 0))),
        compiler_params=_compiler_params(),
    )(patches, wmat)

    stats = stats.reshape(grid_m, 8, c)
    total = jnp.sum(stats[:, 0, :], axis=0)
    total_sq = jnp.sum(stats[:, 1, :], axis=0)
    mean = total / m
    var = jnp.maximum(total_sq / m - mean * mean, 0.0)   # biased batch variance
    return conv, mean, var


def _bn_res_relu6(conv_v, scale_v, bias_v, res_v, row_target):
    mf, cf = conv_v.shape
    n_big = 3 if res_v is not None else 2
    row_bytes = 2 * cf * 4 * n_big
    fixed = 2 * (2 * cf * 4 + 8 * cf * 4)
    tm = _pick_rows(mf, row_bytes, fixed, row_target)
    grid_m = mf // tm

    big_spec = pl.BlockSpec((tm, cf), lambda i: (i, 0))
    vec_spec = pl.BlockSpec((1, cf), lambda i: (0, 0))
    if res_v is None:
        kernel = _bn_act_kernel
        operands = (conv_v, scale_v, bias_v)
        in_specs = [big_spec, vec_spec, vec_spec]
    else:
        kernel = _bn_act_res_kernel
        operands = (conv_v, scale_v, bias_v, res_v)
        in_specs = [big_spec, vec_spec, vec_spec, big_spec]

    y, mx = pl.pallas_call(
        kernel,
        out_shape=(jax.ShapeDtypeStruct((mf, cf), jnp.float32),
                   jax.ShapeDtypeStruct((grid_m * 8, cf), jnp.float32)),
        grid=(grid_m,),
        in_specs=in_specs,
        out_specs=(big_spec, pl.BlockSpec((8, cf), lambda i: (i, 0))),
        compiler_params=_compiler_params(),
    )(*operands)

    s = jnp.max(mx)          # y >= 0, so the zero filler rows never raise the max
    return y, s


def _ste_quant(y_v, s, row_target):
    mf, cf = y_v.shape
    row_bytes = 2 * cf * 4 * 2
    tm = _pick_rows(mf, row_bytes, 0, row_target)
    grid_m = mf // tm
    tile_spec = pl.BlockSpec((tm, cf), lambda i: (i, 0))
    return pl.pallas_call(
        _quant_kernel,
        out_shape=jax.ShapeDtypeStruct((mf, cf), jnp.float32),
        grid=(grid_m,),
        in_specs=[tile_spec, pl.BlockSpec((1, 1), lambda i: (0, 0))],
        out_specs=tile_spec,
        compiler_params=_compiler_params(),
    )(y_v, s.reshape(1, 1).astype(jnp.float32))


def _conv_bn_act_stage(x_nhwc, w_oihw, gamma, beta, residual_flat, block_rows):
    """conv3x3 -> BN(batch stats) -> (+residual) -> ReLU6 -> STE quant."""
    n, h, w, _ = x_nhwc.shape
    m = n * h * w
    cout = w_oihw.shape[0]

    patches = _im2col(x_nhwc.astype(jnp.bfloat16))                # (M, 9*Cin) bf16
    wmat = _conv_weight_to_matmul(w_oihw).astype(jnp.bfloat16)    # (9*Cin, Cout)

    conv, mean, var = _conv_stats(patches, wmat, block_rows)

    # Fold BN into one scale/bias pair (tiny C-length JAX math between kernels).
    scale = gamma * jax.lax.rsqrt(var + BN_EPS)
    bias = beta - mean * scale

    # Lane-dense folded view for the elementwise passes.
    f = _fold_factor(m, cout)
    cf, mf = f * cout, m // f
    row_target = max(8, block_rows // f)
    conv_v = conv.reshape(mf, cf)
    scale_v = jnp.tile(scale, f).reshape(1, cf)
    bias_v = jnp.tile(bias, f).reshape(1, cf)
    res_v = None if residual_flat is None else residual_flat.reshape(mf, cf)

    y, s = _bn_res_relu6(conv_v, scale_v, bias_v, res_v, row_target)
    q = _ste_quant(y, s, row_target)
    return q.reshape(m, cout)


@functools.partial(jax.jit, static_argnames=("block_rows",))
def basic_block_forward(x_nchw, temp, params, *, block_rows=2048):
    """BasicBlock.forward(x, temp): stride=1, downsample=None (inplanes==planes)."""
    del temp  # TODO(synk): BitConv2d `temp` gating not reproducible without its source.
    n, c, h, w = x_nchw.shape
    x_nhwc = jnp.transpose(x_nchw, (0, 2, 3, 1)).astype(jnp.float32)
    m = n * h * w
    planes = params["conv1_w"].shape[0]

    # stage 1: conv1 -> bn1 -> relu6 -> STE    (no residual; no zeros DMA'd)
    h1 = _conv_bn_act_stage(x_nhwc, params["conv1_w"], params["bn1_gamma"],
                            params["bn1_beta"], None, block_rows)

    # stage 2: conv2 -> bn2 -> (+x) -> relu6 -> STE
    h1_nhwc = h1.reshape(n, h, w, planes)
    out = _conv_bn_act_stage(h1_nhwc, params["conv2_w"], params["bn2_gamma"],
                             params["bn2_beta"], x_nhwc.reshape(m, c), block_rows)

    return jnp.transpose(out.reshape(n, h, w, planes), (0, 3, 1, 2))


def init_params(key, inplanes, planes):
    k1, k2 = jax.random.split(key)
    fan1 = inplanes * 9
    fan2 = planes * 9
    return {
        # conv3x3 weights, PyTorch layout (Cout, Cin, 3, 3), no bias
        "conv1_w": jax.random.normal(k1, (planes, inplanes, 3, 3), jnp.float32)
        * (2.0 / fan1) ** 0.5,
        "conv2_w": jax.random.normal(k2, (planes, planes, 3, 3), jnp.float32)
        * (2.0 / fan2) ** 0.5,
        # fresh BatchNorm2d: gamma=1, beta=0
        "bn1_gamma": jnp.ones((planes,), jnp.float32),
        "bn1_beta": jnp.zeros((planes,), jnp.float32),
        "bn2_gamma": jnp.ones((planes,), jnp.float32),
        "bn2_beta": jnp.zeros((planes,), jnp.float32),
    }


if __name__ == "__main__":
    key = jax.random.PRNGKey(0)
    kx, kp = jax.random.split(key)

    # downsample=None requires inplanes == planes and stride == 1
    N, planes, H, W = 2, 8, 16, 16
    x = jax.random.normal(kx, (N, planes, H, W), jnp.float32)
    temp = jnp.float32(1.0)
    params = init_params(kp, planes, planes)

    # Small block_rows so the toy shapes exercise the multi-tile grid path;
    # real ImageNet sizes should use the default (2048, VMEM-budget-capped).
    out = basic_block_forward(x, temp, params, block_rows=128)
    out = jax.block_until_ready(out)
    assert out.shape == (N, planes, H, W), out.shape
    print("KERNEL_OK")
</pallas_src>

<mosaic_0001>
module attributes {stable_mosaic.version = 11 : i64} {
  func.func @_conv_stats_kernel(%arg0: i32, %arg1: memref<128x72xbf16, #tpu.memory_space<vmem>>, %arg2: memref<72x8xbf16, #tpu.memory_space<vmem>>, %arg3: memref<128x8xf32, #tpu.memory_space<vmem>>, %arg4: memref<8x8xf32, #tpu.memory_space<vmem>>) attributes {dimension_semantics = [#tpu.dimension_semantics<parallel>], iteration_bounds = array<i64: 4>, scalar_prefetch = 0 : i64, scratch_operands = 0 : i64, tpu.core_type = #tpu.core_type<tc>, window_params = [{transform_indices = @transform_0, window_bounds = array<i64: 128, 72>}, {pipeline_mode = #tpu.pipeline_mode<synchronous>, transform_indices = @transform_1, window_bounds = array<i64: 72, 8>}, {transform_indices = @transform_2, window_bounds = array<i64: 128, 8>}, {transform_indices = @transform_3, window_bounds = array<i64: 8, 8>}]} {
    %c0 = arith.constant 0 : index
    %c0_0 = arith.constant 0 : index
    %0 = vector.load %arg1[%c0, %c0_0] : memref<128x72xbf16, #tpu.memory_space<vmem>>, vector<128x72xbf16>
    %c0_1 = arith.constant 0 : index
    %c0_2 = arith.constant 0 : index
    %1 = vector.load %arg2[%c0_1, %c0_2] : memref<72x8xbf16, #tpu.memory_space<vmem>>, vector<72x8xbf16>
    %cst = arith.constant dense<0.000000e+00> : vector<128x8xf32>
    %2 = tpu.matmul %0, %1, %cst {dimension_numbers = #tpu.dot_dimension_numbers<[1], [0], [0], [1], [0, 0, 1, 1], [], []>} : vector<128x72xbf16>, vector<72x8xbf16>, vector<128x8xf32> -> vector<128x8xf32>
    %c0_3 = arith.constant 0 : index
    %c0_4 = arith.constant 0 : index
    %3 = vector.load %arg3[%c0_3, %c0_4] : memref<128x8xf32, #tpu.memory_space<vmem>>, vector<128x8xf32>
    tpu.vector_store %arg3[%c0_3, %c0_4], %2 {strides = array<i32>} : memref<128x8xf32, #tpu.memory_space<vmem>>, vector<128x8xf32>,
    %cst_5 = arith.constant dense<0.000000e+00> : vector<8xf32>
    %4 = vector.multi_reduction <add>, %2, %cst_5 [0] : vector<128x8xf32> to vector<8xf32>
    %5 = vector.shape_cast %4 : vector<8xf32> to vector<1x8xf32>
    %6 = arith.mulf %2, %2 : vector<128x8xf32>
    %cst_6 = arith.constant dense<0.000000e+00> : vector<8xf32>
    %7 = vector.multi_reduction <add>, %6, %cst_6 [0] : vector<128x8xf32> to vector<8xf32>
    %8 = vector.shape_cast %7 : vector<8xf32> to vector<1x8xf32>
    %9 = tpu.iota {dimensions = array<i32: 0>} : vector<8x8xi32>
    %c0_i32 = arith.constant 0 : i32
    %10 = vector.broadcast %c0_i32 : i32 to vector<8x8xi32>
    %11 = arith.cmpi eq, %9, %10 : vector<8x8xi32>
    %12 = vector.shape_cast %5 : vector<1x8xf32> to vector<1x8xf32>
    %13 = vector.broadcast %12 : vector<1x8xf32> to vector<8x8xf32>
    %cst_7 = arith.constant 0.000000e+00 : f32
    %14 = vector.broadcast %cst_7 : f32 to vector<8x8xf32>
    %15 = arith.select %11, %13, %14 : vector<8x8xi1>, vector<8x8xf32>
    %c1_i32 = arith.constant 1 : i32
    %16 = vector.broadcast %c1_i32 : i32 to vector<8x8xi32>
    %17 = arith.cmpi eq, %9, %16 : vector<8x8xi32>
    %18 = vector.shape_cast %8 : vector<1x8xf32> to vector<1x8xf32>
    %19 = vector.broadcast %18 : vector<1x8xf32> to vector<8x8xf32>
    %20 = arith.select %17, %19, %15 : vector<8x8xi1>, vector<8x8xf32>
    %c0_8 = arith.constant 0 : index
    %c0_9 = arith.constant 0 : index
    %21 = vector.load %arg4[%c0_8, %c0_9] : memref<8x8xf32, #tpu.memory_space<vmem>>, vector<8x8xf32>
    tpu.vector_store %arg4[%c0_8, %c0_9], %20 {strides = array<i32>} : memref<8x8xf32, #tpu.memory_space<vmem>>, vector<8x8xf32>,
    return
  }
  func.func @transform_0(%arg0: i32) -> (i32, i32) {
    %c0_i32 = arith.constant 0 : i32
    %c0_i32_0 = arith.constant 0 : i32
    return %arg0, %c0_i32 : i32, i32
  }
  func.func @transform_1(%arg0: i32) -> (i32, i32) {
    %c0_i32 = arith.constant 0 : i32
    %c0_i32_0 = arith.constant 0 : i32
    %c0_i32_1 = arith.constant 0 : i32
    return %c0_i32, %c0_i32_0 : i32, i32
  }
  func.func @transform_2(%arg0: i32) -> (i32, i32) {
    %c0_i32 = arith.constant 0 : i32
    %c0_i32_0 = arith.constant 0 : i32
    return %arg0, %c0_i32 : i32, i32
  }
  func.func @transform_3(%arg0: i32) -> (i32, i32) {
    %c0_i32 = arith.constant 0 : i32
    %c0_i32_0 = arith.constant 0 : i32
    return %arg0, %c0_i32 : i32, i32
  }
}

module attributes {stable_mosaic.version = 11 : i64} {
  func.func @_bn_act_kernel(%arg0: i32, %arg1: memref<8x128xf32, #tpu.memory_space<vmem>>, %arg2: memref<1x128xf32, #tpu.memory_space<vmem>>, %arg3: memref<1x128xf32, #tpu.memory_space<vmem>>, %arg4: memref<8x128xf32, #tpu.memory_space<vmem>>, %arg5: memref<8x128xf32, #tpu.memory_space<vmem>>) attributes {dimension_semantics = [#tpu.dimension_semantics<parallel>], iteration_bounds = array<i64: 4>, scalar_prefetch = 0 : i64, scratch_operands = 0 : i64, tpu.core_type = #tpu.core_type<tc>, window_params = [{transform_indices = @transform_0, window_bounds = array<i64: 8, 128>}, {pipeline_mode = #tpu.pipeline_mode<synchronous>, transform_indices = @transform_1, window_bounds = array<i64: 1, 128>}, {pipeline_mode = #tpu.pipeline_mode<synchronous>, transform_indices = @transform_2, window_bounds = array<i64: 1, 128>}, {transform_indices = @transform_3, window_bounds = array<i64: 8, 128>}, {transform_indices = @transform_4, window_bounds = array<i64: 8, 128>}]} {
    %c0 = arith.constant 0 : index
    %c0_0 = arith.constant 0 : index
    %0 = vector.load %arg1[%c0, %c0_0] : memref<8x128xf32, #tpu.memory_space<vmem>>, vector<8x128xf32>
    %c0_1 = arith.constant 0 : index
    %c0_2 = arith.constant 0 : index
    %1 = vector.load %arg2[%c0_1, %c0_2] : memref<1x128xf32, #tpu.memory_space<vmem>>, vector<1x128xf32>
    %2 = vector.broadcast %1 : vector<1x128xf32> to vector<8x128xf32>
    %3 = arith.mulf %0, %2 : vector<8x128xf32>
    %c0_3 = arith.constant 0 : index
    %c0_4 = arith.constant 0 : index
    %4 = vector.load %arg3[%c0_3, %c0_4] : memref<1x128xf32, #tpu.memory_space<vmem>>, vector<1x128xf32>
    %5 = vector.broadcast %4 : vector<1x128xf32> to vector<8x128xf32>
    %6 = arith.addf %3, %5 : vector<8x128xf32>
    %cst = arith.constant 0.000000e+00 : f32
    %cst_5 = arith.constant 6.000000e+00 : f32
    %7 = vector.broadcast %cst : f32 to vector<8x128xf32>
    %8 = arith.maximumf %7, %6 : vector<8x128xf32>
    %9 = vector.broadcast %cst_5 : f32 to vector<8x128xf32>
    %10 = arith.minimumf %9, %8 : vector<8x128xf32>
    %c0_6 = arith.constant 0 : index
    %c0_7 = arith.constant 0 : index
    %11 = vector.load %arg4[%c0_6, %c0_7] : memref<8x128xf32, #tpu.memory_space<vmem>>, vector<8x128xf32>
    tpu.vector_store %arg4[%c0_6, %c0_7], %10 {strides = array<i32>} : memref<8x128xf32, #tpu.memory_space<vmem>>, vector<8x128xf32>,
    %cst_8 = arith.constant dense<0xFF800000> : vector<128xf32>
    %12 = vector.multi_reduction <maximumf>, %10, %cst_8 [0] : vector<8x128xf32> to vector<128xf32>
    %13 = vector.shape_cast %12 : vector<128xf32> to vector<1x128xf32>
    %14 = tpu.iota {dimensions = array<i32: 0>} : vector<8x128xi32>
    %c0_i32 = arith.constant 0 : i32
    %15 = vector.broadcast %c0_i32 : i32 to vector<8x128xi32>
    %16 = arith.cmpi eq, %14, %15 : vector<8x128xi32>
    %17 = vector.shape_cast %13 : vector<1x128xf32> to vector<1x128xf32>
    %18 = vector.broadcast %17 : vector<1x128xf32> to vector<8x128xf32>
    %cst_9 = arith.constant 0.000000e+00 : f32
    %19 = vector.broadcast %cst_9 : f32 to vector<8x128xf32>
    %20 = arith.select %16, %18, %19 : vector<8x128xi1>, vector<8x128xf32>
    %c0_10 = arith.constant 0 : index
    %c0_11 = arith.constant 0 : index
    %21 = vector.load %arg5[%c0_10, %c0_11] : memref<8x128xf32, #tpu.memory_space<vmem>>, vector<8x128xf32>
    tpu.vector_store %arg5[%c0_10, %c0_11], %20 {strides = array<i32>} : memref<8x128xf32, #tpu.memory_space<vmem>>, vector<8x128xf32>,
    return
  }
  func.func @transform_0(%arg0: i32) -> (i32, i32) {
    %c0_i32 = arith.constant 0 : i32
    %c0_i32_0 = arith.constant 0 : i32
    return %arg0, %c0_i32 : i32, i32
  }
  func.func @transform_1(%arg0: i32) -> (i32, i32) {
    %c0_i32 = arith.constant 0 : i32
    %c0_i32_0 = arith.constant 0 : i32
    %c0_i32_1 = arith.constant 0 : i32
    return %c0_i32, %c0_i32_0 : i32, i32
  }
  func.func @transform_2(%arg0: i32) -> (i32, i32) {
    %c0_i32 = arith.constant 0 : i32
    %c0_i32_0 = arith.constant 0 : i32
    %c0_i32_1 = arith.constant 0 : i32
    return %c0_i32, %c0_i32_0 : i32, i32
  }
  func.func @transform_3(%arg0: i32) -> (i32, i32) {
    %c0_i32 = arith.constant 0 : i32
    %c0_i32_0 = arith.constant 0 : i32
    return %arg0, %c0_i32 : i32, i32
  }
  func.func @transform_4(%arg0: i32) -> (i32, i32) {
    %c0_i32 = arith.constant 0 : i32
    %c0_i32_0 = arith.constant 0 : i32
    return %arg0, %c0_i32 : i32, i32
  }
}

module attributes {stable_mosaic.version = 11 : i64} {
  func.func @_quant_kernel(%arg0: i32, %arg1: memref<8x128xf32, #tpu.memory_space<vmem>>, %arg2: memref<1x1xf32, #tpu.memory_space<vmem>>, %arg3: memref<8x128xf32, #tpu.memory_space<vmem>>) attributes {dimension_semantics = [#tpu.dimension_semantics<parallel>], iteration_bounds = array<i64: 4>, scalar_prefetch = 0 : i64, scratch_operands = 0 : i64, tpu.core_type = #tpu.core_type<tc>, window_params = [{transform_indices = @transform_0, window_bounds = array<i64: 8, 128>}, {pipeline_mode = #tpu.pipeline_mode<synchronous>, transform_indices = @transform_1, window_bounds = array<i64: 1, 1>}, {transform_indices = @transform_2, window_bounds = array<i64: 8, 128>}]} {
    %c0 = arith.constant 0 : index
    %c0_0 = arith.constant 0 : index
    %0 = vector.load %arg2[%c0, %c0_0] : memref<1x1xf32, #tpu.memory_space<vmem>>, vector<1x1xf32>
    %cst = arith.constant 0.000000e+00 : f32
    %1 = vector.broadcast %cst : f32 to vector<1x1xf32>
    %2 = arith.cmpf oeq, %0, %1 : vector<1x1xf32>
    %cst_1 = arith.constant 1.000000e+00 : f32
    %3 = vector.broadcast %cst_1 : f32 to vector<1x1xf32>
    %4 = arith.select %2, %3, %0 : vector<1x1xi1>, vector<1x1xf32>
    %5 = tpu.reciprocal %4 {approx = true} : vector<1x1xf32> -> vector<1x1xf32>
    %c0_2 = arith.constant 0 : index
    %c0_3 = arith.constant 0 : index
    %6 = vector.load %arg1[%c0_2, %c0_3] : memref<8x128xf32, #tpu.memory_space<vmem>>, vector<8x128xf32>
    %cst_4 = arith.constant 1.500000e+01 : f32
    %7 = vector.broadcast %cst_4 : f32 to vector<1x1xf32>
    %8 = arith.mulf %7, %5 : vector<1x1xf32>
    %9 = vector.broadcast %8 : vector<1x1xf32> to vector<8x128xf32>
    %10 = arith.mulf %6, %9 : vector<8x128xf32>
    %11 = math.roundeven %10 : vector<8x128xf32>
    %cst_5 = arith.constant 0.0666666701 : f32
    %12 = vector.broadcast %cst_5 : f32 to vector<8x128xf32>
    %13 = arith.mulf %11, %12 : vector<8x128xf32>
    %14 = vector.broadcast %0 : vector<1x1xf32> to vector<8x128xf32>
    %15 = arith.mulf %14, %13 : vector<8x128xf32>
    %c0_6 = arith.constant 0 : index
    %c0_7 = arith.constant 0 : index
    %16 = vector.load %arg3[%c0_6, %c0_7] : memref<8x128xf32, #tpu.memory_space<vmem>>, vector<8x128xf32>
    tpu.vector_store %arg3[%c0_6, %c0_7], %15 {strides = array<i32>} : memref<8x128xf32, #tpu.memory_space<vmem>>, vector<8x128xf32>,
    return
  }
  func.func @transform_0(%arg0: i32) -> (i32, i32) {
    %c0_i32 = arith.constant 0 : i32
    %c0_i32_0 = arith.constant 0 : i32
    return %arg0, %c0_i32 : i32, i32
  }
  func.func @transform_1(%arg0: i32) -> (i32, i32) {
    %c0_i32 = arith.constant 0 : i32
    %c0_i32_0 = arith.constant 0 : i32
    %c0_i32_1 = arith.constant 0 : i32
    return %c0_i32, %c0_i32_0 : i32, i32
  }
  func.func @transform_2(%arg0: i32) -> (i32, i32) {
    %c0_i32 = arith.constant 0 : i32
    %c0_i32_0 = arith.constant 0 : i32
    return %arg0, %c0_i32 : i32, i32
  }
}

module attributes {stable_mosaic.version = 11 : i64} {
  func.func @_bn_act_res_kernel(%arg0: i32, %arg1: memref<8x128xf32, #tpu.memory_space<vmem>>, %arg2: memref<1x128xf32, #tpu.memory_space<vmem>>, %arg3: memref<1x128xf32, #tpu.memory_space<vmem>>, %arg4: memref<8x128xf32, #tpu.memory_space<vmem>>, %arg5: memref<8x128xf32, #tpu.memory_space<vmem>>, %arg6: memref<8x128xf32, #tpu.memory_space<vmem>>) attributes {dimension_semantics = [#tpu.dimension_semantics<parallel>], iteration_bounds = array<i64: 4>, scalar_prefetch = 0 : i64, scratch_operands = 0 : i64, tpu.core_type = #tpu.core_type<tc>, window_params = [{transform_indices = @transform_0, window_bounds = array<i64: 8, 128>}, {pipeline_mode = #tpu.pipeline_mode<synchronous>, transform_indices = @transform_1, window_bounds = array<i64: 1, 128>}, {pipeline_mode = #tpu.pipeline_mode<synchronous>, transform_indices = @transform_2, window_bounds = array<i64: 1, 128>}, {transform_indices = @transform_3, window_bounds = array<i64: 8, 128>}, {transform_indices = @transform_4, window_bounds = array<i64: 8, 128>}, {transform_indices = @transform_5, window_bounds = array<i64: 8, 128>}]} {
    %c0 = arith.constant 0 : index
    %c0_0 = arith.constant 0 : index
    %0 = vector.load %arg1[%c0, %c0_0] : memref<8x128xf32, #tpu.memory_space<vmem>>, vector<8x128xf32>
    %c0_1 = arith.constant 0 : index
    %c0_2 = arith.constant 0 : index
    %1 = vector.load %arg2[%c0_1, %c0_2] : memref<1x128xf32, #tpu.memory_space<vmem>>, vector<1x128xf32>
    %2 = vector.broadcast %1 : vector<1x128xf32> to vector<8x128xf32>
    %3 = arith.mulf %0, %2 : vector<8x128xf32>
    %c0_3 = arith.constant 0 : index
    %c0_4 = arith.constant 0 : index
    %4 = vector.load %arg3[%c0_3, %c0_4] : memref<1x128xf32, #tpu.memory_space<vmem>>, vector<1x128xf32>
    %5 = vector.broadcast %4 : vector<1x128xf32> to vector<8x128xf32>
    %6 = arith.addf %3, %5 : vector<8x128xf32>
    %c0_5 = arith.constant 0 : index
    %c0_6 = arith.constant 0 : index
    %7 = vector.load %arg4[%c0_5, %c0_6] : memref<8x128xf32, #tpu.memory_space<vmem>>, vector<8x128xf32>
    %8 = arith.addf %6, %7 : vector<8x128xf32>
    %cst = arith.constant 0.000000e+00 : f32
    %cst_7 = arith.constant 6.000000e+00 : f32
    %9 = vector.broadcast %cst : f32 to vector<8x128xf32>
    %10 = arith.maximumf %9, %8 : vector<8x128xf32>
    %11 = vector.broadcast %cst_7 : f32 to vector<8x128xf32>
    %12 = arith.minimumf %11, %10 : vector<8x128xf32>
    %c0_8 = arith.constant 0 : index
    %c0_9 = arith.constant 0 : index
    %13 = vector.load %arg5[%c0_8, %c0_9] : memref<8x128xf32, #tpu.memory_space<vmem>>, vector<8x128xf32>
    tpu.vector_store %arg5[%c0_8, %c0_9], %12 {strides = array<i32>} : memref<8x128xf32, #tpu.memory_space<vmem>>, vector<8x128xf32>,
    %cst_10 = arith.constant dense<0xFF800000> : vector<128xf32>
    %14 = vector.multi_reduction <maximumf>, %12, %cst_10 [0] : vector<8x128xf32> to vector<128xf32>
    %15 = vector.shape_cast %14 : vector<128xf32> to vector<1x128xf32>
    %16 = tpu.iota {dimensions = array<i32: 0>} : vector<8x128xi32>
    %c0_i32 = arith.constant 0 : i32
    %17 = vector.broadcast %c0_i32 : i32 to vector<8x128xi32>
    %18 = arith.cmpi eq, %16, %17 : vector<8x128xi32>
    %19 = vector.shape_cast %15 : vector<1x128xf32> to vector<1x128xf32>
    %20 = vector.broadcast %19 : vector<1x128xf32> to vector<8x128xf32>
    %cst_11 = arith.constant 0.000000e+00 : f32
    %21 = vector.broadcast %cst_11 : f32 to vector<8x128xf32>
    %22 = arith.select %18, %20, %21 : vector<8x128xi1>, vector<8x128xf32>
    %c0_12 = arith.constant 0 : index
    %c0_13 = arith.constant 0 : index
    %23 = vector.load %arg6[%c0_12, %c0_13] : memref<8x128xf32, #tpu.memory_space<vmem>>, vector<8x128xf32>
    tpu.vector_store %arg6[%c0_12, %c0_13], %22 {strides = array<i32>} : memref<8x128xf32, #tpu.memory_space<vmem>>, vector<8x128xf32>,
    return
  }
  func.func @transform_0(%arg0: i32) -> (i32, i32) {
    %c0_i32 = arith.constant 0 : i32
    %c0_i32_0 = arith.constant 0 : i32
    return %arg0, %c0_i32 : i32, i32
  }
  func.func @transform_1(%arg0: i32) -> (i32, i32) {
    %c0_i32 = arith.constant 0 : i32
    %c0_i32_0 = arith.constant 0 : i32
    %c0_i32_1 = arith.constant 0 : i32
    return %c0_i32, %c0_i32_0 : i32, i32
  }
  func.func @transform_2(%arg0: i32) -> (i32, i32) {
    %c0_i32 = arith.constant 0 : i32
    %c0_i32_0 = arith.constant 0 : i32
    %c0_i32_1 = arith.constant 0 : i32
    return %c0_i32, %c0_i32_0 : i32, i32
  }
  func.func @transform_3(%arg0: i32) -> (i32, i32) {
    %c0_i32 = arith.constant 0 : i32
    %c0_i32_0 = arith.constant 0 : i32
    return %arg0, %c0_i32 : i32, i32
  }
  func.func @transform_4(%arg0: i32) -> (i32, i32) {
    %c0_i32 = arith.constant 0 : i32
    %c0_i32_0 = arith.constant 0 : i32
    return %arg0, %c0_i32 : i32, i32
  }
  func.func @transform_5(%arg0: i32) -> (i32, i32) {
    %c0_i32 = arith.constant 0 : i32
    %c0_i32_0 = arith.constant 0 : i32
    return %arg0, %c0_i32 : i32, i32
  }
}

</mosaic_0001>

<llo_original>
// kernel: tile.23
$region0: #{tile.23}
  #allocation0 [shape = 's32[1]{0}', space=sflag, size = 0x4, scoped, tag = 'scoped memory for tile.23']
  %s0 = inlined_call_operand.vmem [shape: f32[8], index: 0, kind: input, shape index: {}]
  %s1 = inlined_call_operand.vmem [shape: f32[16,8], index: 1, kind: output, shape index: {}]
  // Predicated region
  $region2: #{tile.23} parent=0 // pred_check
    _
  $region3: #{tile.23} parent=0 // pred_check_branch
    %3 = sbr.rel (0) target = $region5
  $region4: #{tile.23} parent=0 // pred_region
    _
  $region5: #{tile.23} parent=0 // pred_fallthru
    _
  %v4 = vld [vmem:[%s0] ss:$0 sm:$0xff]
  %5 = vst [vmem:[%s1] sm:$0xff] %v4
  %s6 = scalar_lea.vmem %s1, 8
  %7 = vst [vmem:[%s6] sm:$0xff] %v4

// kernel: tile.24
$region0: #{tile.24}
  %s0 = inlined_call_operand.vmem [shape: f32[16,8], index: 0, kind: input, shape index: {}]
  %s1 = inlined_call_operand.vmem [shape: f32[1,128], index: 1, kind: output, shape index: {}]
  $region1: #{tile.24} parent=0
    #allocation0 [shape = 'u8[4096]{0}', space=vmem, size = 0x1000, scoped, tag = 'scoped mem for output reshape']
    %v2 = vld [vmem:[%s0] sm:$0x1]
    %vm3 = vcmask 64512
    %4 = vst.msk [vmem:[#allocation0] sm:$0x1] %vm3, %v2
    %s5 = scalar_lea.vmem %s0, 15
    %v6 = vld [vmem:[%s5] sm:$0x1]
    %7 = vrot.lane.b32.xlu0 %v6, 120
    %v8 = vpop.permute.xlu0 %7
    %vm9 = vcmask 1048512
    %10 = vst.msk [vmem:[#allocation0] sm:$0x1] %vm9, %v8
    %s11 = scalar_lea.vmem %s0, 14
    %v12 = vld [vmem:[%s11] sm:$0x1]
    %13 = vrot.lane.b32.xlu0 %v12, 112
    %v14 = vpop.permute.xlu0 %13
    %vm15 = vcmask 982912
    %16 = vst.msk [vmem:[#allocation0] sm:$0x1] %vm15, %v14
    %s17 = scalar_lea.vmem %s0, 13
    %v18 = vld [vmem:[%s17] sm:$0x1]
    %19 = vrot.lane.b32.xlu0 %v18, 104
    %v20 = vpop.permute.xlu0 %19
    %vm21 = vcmask 917312
    %22 = vst.msk [vmem:[#allocation0] sm:$0x1] %vm21, %v20
    %s23 = scalar_lea.vmem %s0, 12
    %v24 = vld [vmem:[%s23] sm:$0x1]
    %25 = vrot.lane.b32.xlu0 %v24, 96
    %v26 = vpop.permute.xlu0 %25
    %vm27 = vcmask 851712
    %28 = vst.msk [vmem:[#allocation0] sm:$0x1] %vm27, %v26
    %s29 = scalar_lea.vmem %s0, 11
    %v30 = vld [vmem:[%s29] sm:$0x1]
    %31 = vrot.lane.b32.xlu0 %v30, 88
    %v32 = vpop.permute.xlu0 %31
    %vm33 = vcmask 786112
    %34 = vst.msk [vmem:[#allocation0] sm:$0x1] %vm33, %v32
    %s35 = scalar_lea.vmem %s0, 10
    %v36 = vld [vmem:[%s35] sm:$0x1]
    %37 = vrot.lane.b32.xlu0 %v36, 80
    %v38 = vpop.permute.xlu0 %37
    %vm39 = vcmask 720512
    %40 = vst.msk [vmem:[#allocation0] sm:$0x1] %vm39, %v38
    %s41 = scalar_lea.vmem %s0, 9
    %v42 = vld [vmem:[%s41] sm:$0x1]
    %43 = vrot.lane.b32.xlu0 %v42, 72
    %v44 = vpop.permute.xlu0 %43
    %vm45 = vcmask 654912
    %46 = vst.msk [vmem:[#allocation0] sm:$0x1] %vm45, %v44
    %s47 = scalar_lea.vmem %s0, 8
    %v48 = vld [vmem:[%s47] sm:$0x1]
    %49 = vrot.lane.b32.xlu0 %v48, 64
    %v50 = vpop.permute.xlu0 %49
    %vm51 = vcmask 589312
    %52 = vst.msk [vmem:[#allocation0] sm:$0x1] %vm51, %v50
    %s53 = scalar_lea.vmem %s0, 7
    %v54 = vld [vmem:[%s53] sm:$0x1]
    %55 = vrot.lane.b32.xlu0 %v54, 56
    %v56 = vpop.permute.xlu0 %55
    %vm57 = vcmask 523712
    %58 = vst.msk [vmem:[#allocation0] sm:$0x1] %vm57, %v56
    %s59 = scalar_lea.vmem %s0, 6
    %v60 = vld [vmem:[%s59] sm:$0x1]
    %61 = vrot.lane.b32.xlu0 %v60, 48
    %v62 = vpop.permute.xlu0 %61
    %vm63 = vcmask 458112
    %64 = vst.msk [vmem:[#allocation0] sm:$0x1] %vm63, %v62
    %s65 = scalar_lea.vmem %s0, 5
    %v66 = vld [vmem:[%s65] sm:$0x1]
    %67 = vrot.lane.b32.xlu0 %v66, 40
    %v68 = vpop.permute.xlu0 %67
    %vm69 = vcmask 392512
    %70 = vst.msk [vmem:[#allocation0] sm:$0x1] %vm69, %v68
    %s71 = scalar_lea.vmem %s0, 4
    %v72 = vld [vmem:[%s71] sm:$0x1]
    %73 = vrot.lane.b32.xlu0 %v72, 32
    %v74 = vpop.permute.xlu0 %73
    %vm75 = vcmask 326912
    %76 = vst.msk [vmem:[#allocation0] sm:$0x1] %vm75, %v74
    %s77 = scalar_lea.vmem %s0, 3
    %v78 = vld [vmem:[%s77] sm:$0x1]
    %79 = vrot.lane.b32.xlu0 %v78, 24
    %v80 = vpop.permute.xlu0 %79
    %vm81 = vcmask 261312
    %82 = vst.msk [vmem:[#allocation0] sm:$0x1] %vm81, %v80
    %s83 = scalar_lea.vmem %s0, 2
    %v84 = vld [vmem:[%s83] sm:$0x1]
    %85 = vrot.lane.b32.xlu0 %v84, 16
    %v86 = vpop.permute.xlu0 %85
    %vm87 = vcmask 195712
    %88 = vst.msk [vmem:[#allocation0] sm:$0x1] %vm87, %v86
    %s89 = scalar_lea.vmem %s0, 1
    %v90 = vld [vmem:[%s89] sm:$0x1]
    %91 = vrot.lane.b32.xlu0 %v90, 8
    %v92 = vpop.permute.xlu0 %91
    %vm93 = vcmask 130112
    %94 = vst.msk [vmem:[#allocation0] sm:$0x1] %vm93, %v92
    %s96 = ssub.s32 2, 1
    %v97 = vld [vmem:[#allocation0] sm:%s96]
    %s99 = ssub.s32 2, 1
    %100 = vst [vmem:[%s1] sm:%s99] %v97

// kernel: basic_block_forward.6
$region0: #{basic_block_forward.6}
  #allocation0 [shape = 'u32[]', space=smem, size = 0x4, offset = 0x4, fixed_abs, tag = 'smem constant byte address 0x4 - core index']
  #allocation1 [shape = 'u32[72,128]{1,0:T(1,128)}', space=vmem, size = 0x9000, scoped, tag = 'internal scratch']
  %s0 = inlined_call_operand.vmem [shape: bf16[512,72], index: 0, kind: input, shape index: {}]
  %s1 = inlined_call_operand.vmem [shape: bf16[72,8], index: 1, kind: input, shape index: {}]
  %s2 = inlined_call_operand.vmem [shape: f32[512,8], index: 2, kind: output, shape index: {0}]
  %s3 = inlined_call_operand.vmem [shape: f32[32,8], index: 3, kind: output, shape index: {1}]
  %4 = xla_tuple %s2, %s3
  %s5 = sld [smem:[#allocation0]]
  $region49: #{basic_block_forward.6} parent=0
    _
  %s7 = ssub.s32 1, %s5
  %s8 = scalar_select 0, %s7, %s5
  loop: start=0, step=1, limit=6
  $region2: #{basic_block_forward.6} parent=0 // loop_pre_header
    _
  $region3: #{basic_block_forward.6} parent=0 // loop_header
    %s10 = sphi 0, %s14
    %p11 = scmp.ge.s32.totalorder %s10, 6
    %s20 = sphi 0, %s22
    %s23 = sphi 0, %s20
    %s24 = sphi 0, %s23
    %s40 = sphi 0, %s24
    %s44 = sphi 0, %s44
    %s46 = sphi 0, %s44
    %s47 = sphi 0, %s46
    %s61 = sphi 0, %s47
    %s67 = sphi 0, %s69
    %s70 = sphi 0, %s67
    %s71 = sphi 0, %s70
    %s87 = sphi 0, %s71
    %s93 = sphi 0, %s95
    %s96 = sphi 0, %s93
    %s97 = sphi 0, %s96
    %s113 = sphi 0, %s97
  $region4: #{basic_block_forward.6} parent=0 // loop_header_branch
    %13 = sbr.rel (%p11) target = $region8
  $region5: #{basic_block_forward.6} parent=0 // loop_body
    %s15 = ssub.s32 %s10, 1
    %s16 = ssub.s32 %s10, 2
    %s17 = sadd.s32 %s10, 1
    %s18 = ssub.s32 %s10, %s17
    %p19 = scmp.eq.s32.totalorder %s18, 0
    %s21 = sadd.s32 %s20, 1
    %s22 = scalar_select %p19, %s20, %s21
    %p25 = pneg %p19
    %p26 = scmp.eq.s32.totalorder %s10, 3
    %p27 = por %p25, %p26
    %p28 = scmp.ne.s32.totalorder %s20, %s23
    %p29 = scmp.eq.s32.totalorder %s10, 0
    %p30 = por %p28, %p29
    %p31 = scmp.ne.s32.totalorder %s20, %s23
    %p32 = scmp.eq.s32.totalorder %s15, 3
    %p33 = por %p31, %p32
    %p34 = scmp.ne.s32.totalorder %s23, %s24
    %p35 = scmp.eq.s32.totalorder %s15, 0
    %p36 = por %p34, %p35
    %p37 = scmp.ne.s32.totalorder %s23, %s24
    %p38 = scmp.eq.s32.totalorder %s16, 3
    %p39 = por %p37, %p38
    %p41 = scmp.ne.s32.totalorder %s24, %s40
    %p42 = scmp.eq.s32.totalorder %s16, 0
    %p43 = por %p41, %p42
    %s45 = sadd.s32 %s44, 1
    %p48 = scmp.eq.s32.totalorder %s10, 3
    %p49 = scmp.ne.s32.totalorder %s44, %s46
    %p50 = scmp.eq.s32.totalorder %s10, 0
    %p51 = por %p49, %p50
    %p52 = scmp.ne.s32.totalorder %s44, %s46
    %p53 = scmp.eq.s32.totalorder %s15, 3
    %p54 = por %p52, %p53
    %p55 = scmp.ne.s32.totalorder %s46, %s47
    %p56 = scmp.eq.s32.totalorder %s15, 0
    %p57 = por %p55, %p56
    %p58 = scmp.ne.s32.totalorder %s46, %s47
    %p59 = scmp.eq.s32.totalorder %s16, 3
    %p60 = por %p58, %p59
    %p62 = scmp.ne.s32.totalorder %s47, %s61
    %p63 = scmp.eq.s32.totalorder %s16, 0
    %p64 = por %p62, %p63
    %s65 = ssub.s32 %s10, %s17
    %p66 = scmp.eq.s32.totalorder %s65, 0
    %s68 = sadd.s32 %s67, 1
    %s69 = scalar_select %p66, %s67, %s68
    %p72 = pneg %p66
    %p73 = scmp.eq.s32.totalorder %s10, 3
    %p74 = por %p72, %p73
    %p75 = scmp.ne.s32.totalorder %s67, %s70
    %p76 = scmp.eq.s32.totalorder %s10, 0
    %p77 = por %p75, %p76
    %p78 = scmp.ne.s32.totalorder %s67, %s70
    %p79 = scmp.eq.s32.totalorder %s15, 3
    %p80 = por %p78, %p79
    %p81 = scmp.ne.s32.totalorder %s70, %s71
    %p82 = scmp.eq.s32.totalorder %s15, 0
    %p83 = por %p81, %p82
    %p84 = scmp.ne.s32.totalorder %s70, %s71
    %p85 = scmp.eq.s32.totalorder %s16, 3
    %p86 = por %p84, %p85
    %p88 = scmp.ne.s32.totalorder %s71, %s87
    %p89 = scmp.eq.s32.totalorder %s16, 0
    %p90 = por %p88, %p89
    %s91 = ssub.s32 %s10, %s17
    %p92 = scmp.eq.s32.totalorder %s91, 0
    %s94 = sadd.s32 %s93, 1
    %s95 = scalar_select %p92, %s93, %s94
    %p98 = pneg %p92
    %p99 = scmp.eq.s32.totalorder %s10, 3
    %p100 = por %p98, %p99
    %p101 = scmp.ne.s32.totalorder %s93, %s96
    %p102 = scmp.eq.s32.totalorder %s10, 0
    %p103 = por %p101, %p102
    %p104 = scmp.ne.s32.totalorder %s93, %s96
    %p105 = scmp.eq.s32.totalorder %s15, 3
    %p106 = por %p104, %p105
    %p107 = scmp.ne.s32.totalorder %s96, %s97
    %p108 = scmp.eq.s32.totalorder %s15, 0
    %p109 = por %p107, %p108
    %p110 = scmp.ne.s32.totalorder %s96, %s97
    %p111 = scmp.eq.s32.totalorder %s16, 3
    %p112 = por %p110, %p111
    %p114 = scmp.ne.s32.totalorder %s97, %s113
    %p115 = scmp.eq.s32.totalorder %s16, 0
    %p116 = por %p114, %p115
    %p117 = scmp.le.s32.totalorder 1, %s10
    %p118 = scmp.lt.s32.totalorder %s10, 5
    %p119 = pnand %p117, %p118
    %p120 = pneg %p119
    // Predicated region
    $region9: #{basic_block_forward.6} parent=5 // pred_check
      _
    $region10: #{basic_block_forward.6} parent=5 // pred_check_branch
      %122 = sbr.rel (%p119) target = $region12
    $region11: #{basic_block_forward.6} parent=5 // pred_region
      %s123 = ssub.s32 %s10, 1
      // Predicated region
      $region13: #{basic_block_forward.6} parent=11 // pred_check
        %p124 = pneg %p57
      $region14: #{basic_block_forward.6} parent=11 // pred_check_branch
        %126 = sbr.rel (%p124) target = $region16
      $region15: #{basic_block_forward.6} parent=11 // pred_region
        _
      $region16: #{basic_block_forward.6} parent=11 // pred_fallthru
        _
    $region12: #{basic_block_forward.6} parent=5 // pred_fallthru
      _
    %p127 = scmp.lt.s32.totalorder %s10, 4
    // Predicated region
    $region17: #{basic_block_forward.6} parent=5 // pred_check
      %p128 = pneg %p127
    $region18: #{basic_block_forward.6} parent=5 // pred_check_branch
      %130 = sbr.rel (%p128) target = $region20
    $region19: #{basic_block_forward.6} parent=5 // pred_region
      // Predicated region
      $region21: #{basic_block_forward.6} parent=19 // pred_check
        %p131 = pneg %p30
      $region22: #{basic_block_forward.6} parent=19 // pred_check_branch
        %133 = sbr.rel (%p131) target = $region24
      $region23: #{basic_block_forward.6} parent=19 // pred_region
        %s134 = smul.u32 16, %s10
        %p135 = scmp.lt.s32.totalorder %s134, 63
        %s136 = scalar_select %p135, %s134, 63
        %s137 = smul.addr %s136, 4
        %s138 = scalar_lea.vmem %s0, %s137
        %s139 = smul.u32 16, %s10
      $region24: #{basic_block_forward.6} parent=19 // pred_fallthru
        _
    $region20: #{basic_block_forward.6} parent=5 // pred_fallthru
      _
    %p140 = scmp.le.s32.totalorder 1, %s10
    %p141 = scmp.lt.s32.totalorder %s10, 5
    %p142 = pnand %p140, %p141
    %p143 = pneg %p142
    // Predicated region
    $region25: #{basic_block_forward.6} parent=5 // pred_check
      _
    $region26: #{basic_block_forward.6} parent=5 // pred_check_branch
      %145 = sbr.rel (%p142) target = $region28
    $region27: #{basic_block_forward.6} parent=5 // pred_region
      %s146 = ssub.s32 %s10, 1
      %s147 = smul.u32 16, %s15
      %p148 = scmp.lt.s32.totalorder %s147, 63
      %s149 = scalar_select %p148, %s147, 63
      %s150 = smul.addr %s149, 4
      %s151 = scalar_lea.vmem %s0, %s150
      %p152 = pneg %p36
      %p153 = pneg %p33
      %p154 = pneg %p57
      %p155 = pneg %p54
      %p156 = pneg %p83
      %p157 = pneg %p80
      %s158 = smul.u32 16, %s15
      %p159 = scmp.lt.s32.totalorder %s158, 63
      %s160 = scalar_select %p159, %s158, 63
      %s161 = smul.addr %s160, 8
      %s162 = scalar_lea.vmem %s2, %s161
      %p163 = pneg %p109
      %p164 = pneg %p106
      %p165 = scmp.lt.s32.totalorder %s15, 3
      %s166 = scalar_select %p165, %s15, 3
      %s167 = smul.addr %s166, 8
      %s168 = scalar_lea.vmem %s3, %s167
      %s169 = smul.u32 16, %s15
      %p170 = scmp.lt.s32.totalorder %s169, 63
      %s171 = scalar_select %p170, %s169, 63
      %s172 = smul.addr %s171, 4
      %s173 = scalar_lea.vmem %s0, %s172
      %s174 = smul.u32 16, %s15
      %s175 = smul.u32 16, %s15
      %p176 = scmp.lt.s32.totalorder %s175, 63
      %s177 = scalar_select %p176, %s175, 63
      %s178 = smul.addr %s177, 8
      %s179 = scalar_lea.vmem %s2, %s178
      %s180 = smul.u32 16, %s15
      %p181 = scmp.lt.s32.totalorder %s15, 3
      %s182 = scalar_select %p181, %s15, 3
      %s183 = smul.addr %s182, 8
      %s184 = scalar_lea.vmem %s3, %s183
      %v186 = vld [vmem:[%s173] sm:$0xf]
      %v187 = vld [vmem:[%s173 + $0x4] sm:$0xf]
      %v188 = vld [vmem:[%s173 + $0x8] sm:$0xf]
      %v189 = vld [vmem:[%s173 + $0xc] sm:$0xf]
      %v190 = vld [vmem:[%s173 + $0x10] sm:$0xf]
      %v191 = vld [vmem:[%s173 + $0x14] sm:$0xf]
      %v192 = vld [vmem:[%s173 + $0x18] sm:$0xf]
      %v193 = vld [vmem:[%s173 + $0x1c] sm:$0xf]
      %v194 = vld [vmem:[%s173 + $0x20] sm:$0xf]
      %v195 = vld [vmem:[%s173 + $0x24] sm:$0xf]
      %v196 = vld [vmem:[%s173 + $0x28] sm:$0xf]
      %v197 = vld [vmem:[%s173 + $0x2c] sm:$0xf]
      %v198 = vld [vmem:[%s173 + $0x30] sm:$0xf]
      %v199 = vld [vmem:[%s173 + $0x34] sm:$0xf]
      %v200 = vld [vmem:[%s173 + $0x38] sm:$0xf]
      %v201 = vld [vmem:[%s173 + $0x3c] sm:$0xf]
      %v202 = vld [vmem:[%s1] sm:$0xf]
      %v203 = vld [vmem:[%s1 + $0x4] sm:$0xf]
      %v204 = vld [vmem:[%s1 + $0x8] sm:$0xf]
      %v205 = vld [vmem:[%s1 + $0xc] sm:$0xf]
      %v206 = vld [vmem:[%s1 + $0x10] sm:$0xf]
      %v207 = vld [vmem:[%s1 + $0x14] sm:$0xf]
      %v208 = vld [vmem:[%s1 + $0x18] sm:$0xf]
      %v209 = vld [vmem:[%s1 + $0x1c] sm:$0xf]
      %v210 = vld [vmem:[%s1 + $0x20] sm:$0xf]
      %v227 = vunpack.c.l.b16 %v186
      %v228 = vunpack.c.l.b16 %v187
      %v229 = vunpack.c.l.b16 %v188
      %v230 = vunpack.c.l.b16 %v189
      %v231 = vunpack.c.l.b16 %v190
      %v232 = vunpack.c.l.b16 %v191
      %v233 = vunpack.c.l.b16 %v192
      %v234 = vunpack.c.l.b16 %v193
      %v235 = vunpack.c.l.b16 %v194
      %v236 = vunpack.c.l.b16 %v195
      %v237 = vunpack.c.l.b16 %v196
      %v238 = vunpack.c.l.b16 %v197
      %v239 = vunpack.c.l.b16 %v198
      %v240 = vunpack.c.l.b16 %v199
      %v241 = vunpack.c.l.b16 %v200
      %v242 = vunpack.c.l.b16 %v201
      %v243 = vpack.c.b16 %v228, %v227
      %v244 = vpack.c.b16 %v230, %v229
      %v245 = vpack.c.b16 %v232, %v231
      %v246 = vpack.c.b16 %v234, %v233
      %v247 = vpack.c.b16 %v236, %v235
      %v248 = vpack.c.b16 %v238, %v237
      %v249 = vpack.c.b16 %v240, %v239
      %v250 = vpack.c.b16 %v242, %v241
      %v260 = vunpack.c.l.b16 %v202
      %v261 = vunpack.c.l.b16 %v203
      %v262 = vunpack.c.l.b16 %v204
      %v263 = vunpack.c.l.b16 %v205
      %v264 = vunpack.c.l.b16 %v206
      %v265 = vunpack.c.l.b16 %v207
      %v266 = vunpack.c.l.b16 %v208
      %v267 = vunpack.c.l.b16 %v209
      %v268 = vunpack.c.l.b16 %v210
      %v269 = vpack.c.b16 %v261, %v260
      %v270 = vpack.c.b16 %v263, %v262
      %v271 = vpack.c.b16 %v265, %v264
      %v272 = vpack.c.b16 %v267, %v266
      %v273 = vpack.c.b16 %v268, %v268
      %vm278 = vcmask 588800
      %v280 = vsel %vm278, %v243, 0
      %v283 = vsel %vm278, %v244, 0
      %v286 = vsel %vm278, %v245, 0
      %v289 = vsel %vm278, %v246, 0
      %v292 = vsel %vm278, %v247, 0
      %v295 = vsel %vm278, %v248, 0
      %v298 = vsel %vm278, %v249, 0
      %v301 = vsel %vm278, %v250, 0
      %vm303 = vcmask 1043456
      %v305 = vsel %vm303, %v273, 0
      %307 = vmatpush.bf16.msra.mxu0 0
      %308 = vmatpush.bf16.msra.mxu0 0
      %309 = vmatpush.bf16.msra.mxu0 0
      %310 = vmatpush.bf16.msra.mxu0 %v305
      %311 = vmatpush.bf16.msra.mxu0 %v272
      %312 = vmatpush.bf16.msra.mxu0 %v271
      %313 = vmatpush.bf16.msra.mxu0 %v270
      %314 = vmatpush.bf16.msra.mxu0 %v269
      %315 = vmatmul.bf16.gmra.mxu0 %v280
      %v316 = vpop.f32.mrf.mxu0
      %v317 = vadd.f32 0.0, %v316
      %v318 = vpop.f32.mrf.mxu0
      %v319 = vadd.f32 0.0, %v318
      %320 = vmatmul.bf16.gmra.mxu0 %v283
      %v321 = vpop.f32.mrf.mxu0
      %v322 = vadd.f32 0.0, %v321
      %v323 = vpop.f32.mrf.mxu0
      %v324 = vadd.f32 0.0, %v323
      %325 = vmatmul.bf16.gmra.mxu0 %v286
      %v326 = vpop.f32.mrf.mxu0
      %v327 = vadd.f32 0.0, %v326
      %v328 = vpop.f32.mrf.mxu0
      %v329 = vadd.f32 0.0, %v328
      %330 = vmatmul.bf16.gmra.mxu0 %v289
      %v331 = vpop.f32.mrf.mxu0
      %v332 = vadd.f32 0.0, %v331
      %v333 = vpop.f32.mrf.mxu0
      %v334 = vadd.f32 0.0, %v333
      %335 = vmatmul.bf16.gmra.mxu0 %v292
      %v336 = vpop.f32.mrf.mxu0
      %v337 = vadd.f32 0.0, %v336
      %v338 = vpop.f32.mrf.mxu0
      %v339 = vadd.f32 0.0, %v338
      %340 = vmatmul.bf16.gmra.mxu0 %v295
      %v341 = vpop.f32.mrf.mxu0
      %v342 = vadd.f32 0.0, %v341
      %v343 = vpop.f32.mrf.mxu0
      %v344 = vadd.f32 0.0, %v343
      %345 = vmatmul.bf16.gmra.mxu0 %v298
      %v346 = vpop.f32.mrf.mxu0
      %v347 = vadd.f32 0.0, %v346
      %v348 = vpop.f32.mrf.mxu0
      %v349 = vadd.f32 0.0, %v348
      %350 = vmatmul.bf16.gmra.mxu0 %v301
      %v351 = vpop.f32.mrf.mxu0
      %v352 = vadd.f32 0.0, %v351
      %v353 = vpop.f32.mrf.mxu0
      %v354 = vadd.f32 0.0, %v353
      %355 = vdwg.mxu0
      %vm356 = vcmask 64512
      %357 = vst.msk [vmem:[%s179] sm:$0xff] %vm356, %v317
      %358 = vst.msk [vmem:[%s179 + $0x8] sm:$0xff] %vm356, %v319
      %359 = vst.msk [vmem:[%s179 + $0x10] sm:$0xff] %vm356, %v322
      %360 = vst.msk [vmem:[%s179 + $0x18] sm:$0xff] %vm356, %v324
      %361 = vst.msk [vmem:[%s179 + $0x20] sm:$0xff] %vm356, %v327
      %362 = vst.msk [vmem:[%s179 + $0x28] sm:$0xff] %vm356, %v329
      %363 = vst.msk [vmem:[%s179 + $0x30] sm:$0xff] %vm356, %v332
      %364 = vst.msk [vmem:[%s179 + $0x38] sm:$0xff] %vm356, %v334
      %365 = vst.msk [vmem:[%s179 + $0x40] sm:$0xff] %vm356, %v337
      %366 = vst.msk [vmem:[%s179 + $0x48] sm:$0xff] %vm356, %v339
      %367 = vst.msk [vmem:[%s179 + $0x50] sm:$0xff] %vm356, %v342
      %368 = vst.msk [vmem:[%s179 + $0x58] sm:$0xff] %vm356, %v344
      %369 = vst.msk [vmem:[%s179 + $0x60] sm:$0xff] %vm356, %v347
      %370 = vst.msk [vmem:[%s179 + $0x68] sm:$0xff] %vm356, %v349
      %371 = vst.msk [vmem:[%s179 + $0x70] sm:$0xff] %vm356, %v352
      %372 = vst.msk [vmem:[%s179 + $0x78] sm:$0xff] %vm356, %v354
      %v373 = vsel %vm356, %v317, 0.0
      %v374 = vsel %vm356, %v319, 0.0
      %v375 = vadd.f32 %v373, %v374
      %v376 = vsel %vm356, %v322, 0.0
      %v377 = vadd.f32 %v375, %v376
      %v378 = vsel %vm356, %v324, 0.0
      %v379 = vadd.f32 %v377, %v378
      %v380 = vsel %vm356, %v327, 0.0
      %v381 = vadd.f32 %v379, %v380
      %v382 = vsel %vm356, %v329, 0.0
      %v383 = vadd.f32 %v381, %v382
      %v384 = vsel %vm356, %v332, 0.0
      %v385 = vadd.f32 %v383, %v384
      %v386 = vsel %vm356, %v334, 0.0
      %v387 = vadd.f32 %v385, %v386
      %v388 = vsel %vm356, %v337, 0.0
      %v389 = vadd.f32 %v387, %v388
      %v390 = vsel %vm356, %v339, 0.0
      %v391 = vadd.f32 %v389, %v390
      %v392 = vsel %vm356, %v342, 0.0
      %v393 = vadd.f32 %v391, %v392
      %v394 = vsel %vm356, %v344, 0.0
      %v395 = vadd.f32 %v393, %v394
      %v396 = vsel %vm356, %v347, 0.0
      %v397 = vadd.f32 %v395, %v396
      %v398 = vsel %vm356, %v349, 0.0
      %v399 = vadd.f32 %v397, %v398
      %v400 = vsel %vm356, %v352, 0.0
      %v401 = vadd.f32 %v399, %v400
      %v402 = vsel %vm356, %v354, 0.0
      %v403 = vadd.f32 %v401, %v402
      %v404 = vrot.slane %v403, 4
      %v405 = vadd.f32 %v403, %v404
      %v406 = vrot.slane %v405, 2
      %v407 = vadd.f32 %v405, %v406
      %v408 = vrot.slane %v407, 1
      %v409 = vadd.f32 %v407, %v408
      %v410 = vmul.f32 %v317, %v317
      %v411 = vmul.f32 %v319, %v319
      %v412 = vmul.f32 %v322, %v322
      %v413 = vmul.f32 %v324, %v324
      %v414 = vmul.f32 %v327, %v327
      %v415 = vmul.f32 %v329, %v329
      %v416 = vmul.f32 %v332, %v332
      %v417 = vmul.f32 %v334, %v334
      %v418 = vmul.f32 %v337, %v337
      %v419 = vmul.f32 %v339, %v339
      %v420 = vmul.f32 %v342, %v342
      %v421 = vmul.f32 %v344, %v344
      %v422 = vmul.f32 %v347, %v347
      %v423 = vmul.f32 %v349, %v349
      %v424 = vmul.f32 %v352, %v352
      %v425 = vmul.f32 %v354, %v354
      %v426 = vsel %vm356, %v410, 0.0
      %v427 = vsel %vm356, %v411, 0.0
      %v428 = vadd.f32 %v426, %v427
      %v429 = vsel %vm356, %v412, 0.0
      %v430 = vadd.f32 %v428, %v429
      %v431 = vsel %vm356, %v413, 0.0
      %v432 = vadd.f32 %v430, %v431
      %v433 = vsel %vm356, %v414, 0.0
      %v434 = vadd.f32 %v432, %v433
      %v435 = vsel %vm356, %v415, 0.0
      %v436 = vadd.f32 %v434, %v435
      %v437 = vsel %vm356, %v416, 0.0
      %v438 = vadd.f32 %v436, %v437
      %v439 = vsel %vm356, %v417, 0.0
      %v440 = vadd.f32 %v438, %v439
      %v441 = vsel %vm356, %v418, 0.0
      %v442 = vadd.f32 %v440, %v441
      %v443 = vsel %vm356, %v419, 0.0
      %v444 = vadd.f32 %v442, %v443
      %v445 = vsel %vm356, %v420, 0.0
      %v446 = vadd.f32 %v444, %v445
      %v447 = vsel %vm356, %v421, 0.0
      %v448 = vadd.f32 %v446, %v447
      %v449 = vsel %vm356, %v422, 0.0
      %v450 = vadd.f32 %v448, %v449
      %v451 = vsel %vm356, %v423, 0.0
      %v452 = vadd.f32 %v450, %v451
      %v453 = vsel %vm356, %v424, 0.0
      %v454 = vadd.f32 %v452, %v453
      %v455 = vsel %vm356, %v425, 0.0
      %v456 = vadd.f32 %v454, %v455
      %v457 = vrot.slane %v456, 4
      %v458 = vadd.f32 %v456, %v457
      %v459 = vrot.slane %v458, 2
      %v460 = vadd.f32 %v458, %v459
      %v461 = vrot.slane %v460, 1
      %v462 = vadd.f32 %v460, %v461
      %v463 = vlaneseq
      %v464 = vshrl.u32 %v463, 7
      %vm465 = vcmp.eq.s32.totalorder %v464, 0
      %v466 = vsel %vm465, %v409, 0.0
      %vm467 = vcmp.eq.s32.totalorder %v464, 1
      %v468 = vsel %vm467, %v462, %v466
      %469 = vst.msk [vmem:[%s184] sm:$0xff] %vm356, %v468
      %s470 = smul.u32 16, %s15
      %p471 = scmp.lt.s32.totalorder %s470, 63
      %s472 = scalar_select %p471, %s470, 63
      %s473 = smul.addr %s472, 8
      %s474 = scalar_lea.vmem %s2, %s473
      %p475 = scmp.lt.s32.totalorder %s15, 3
      %s476 = scalar_select %p475, %s15, 3
      %s477 = smul.addr %s476, 8
      %s478 = scalar_lea.vmem %s3, %s477
      // Predicated region
      $region29: #{basic_block_forward.6} parent=27 // pred_check
        %p479 = pneg %p80
      $region30: #{basic_block_forward.6} parent=27 // pred_check_branch
        %481 = sbr.rel (%p479) target = $region32
      $region31: #{basic_block_forward.6} parent=27 // pred_region
        %s482 = smul.u32 16, %s15
      $region32: #{basic_block_forward.6} parent=27 // pred_fallthru
        _
      // Predicated region
      $region33: #{basic_block_forward.6} parent=27 // pred_check
        %p483 = pneg %p106
      $region34: #{basic_block_forward.6} parent=27 // pred_check_branch
        %485 = sbr.rel (%p483) target = $region36
      $region35: #{basic_block_forward.6} parent=27 // pred_region
        _
      $region36: #{basic_block_forward.6} parent=27 // pred_fallthru
        _
    $region28: #{basic_block_forward.6} parent=5 // pred_fallthru
      _
    %p486 = scmp.le.s32.totalorder 2, %s10
    // Predicated region
    $region37: #{basic_block_forward.6} parent=5 // pred_check
      %p487 = pneg %p486
    $region38: #{basic_block_forward.6} parent=5 // pred_check_branch
      %489 = sbr.rel (%p487) target = $region40
    $region39: #{basic_block_forward.6} parent=5 // pred_region
      %s490 = ssub.s32 %s10, 2
      // Predicated region
      $region41: #{basic_block_forward.6} parent=39 // pred_check
        %p491 = pneg %p86
      $region42: #{basic_block_forward.6} parent=39 // pred_check_branch
        %493 = sbr.rel (%p491) target = $region44
      $region43: #{basic_block_forward.6} parent=39 // pred_region
        %s494 = smul.u32 16, %s16
        %p495 = scmp.lt.s32.totalorder %s494, 63
        %s496 = scalar_select %p495, %s494, 63
        %s497 = smul.addr %s496, 8
        %s498 = scalar_lea.vmem %s2, %s497
      $region44: #{basic_block_forward.6} parent=39 // pred_fallthru
        _
      // Predicated region
      $region45: #{basic_block_forward.6} parent=39 // pred_check
        %p499 = pneg %p112
      $region46: #{basic_block_forward.6} parent=39 // pred_check_branch
        %501 = sbr.rel (%p499) target = $region48
      $region47: #{basic_block_forward.6} parent=39 // pred_region
        %p502 = scmp.lt.s32.totalorder %s16, 3
        %s503 = scalar_select %p502, %s16, 3
        %s504 = smul.addr %s503, 8
        %s505 = scalar_lea.vmem %s3, %s504
      $region48: #{basic_block_forward.6} parent=39 // pred_fallthru
        _
    $region40: #{basic_block_forward.6} parent=5 // pred_fallthru
      _
  $region6: #{basic_block_forward.6} parent=0 // loop_footer
    %s14 = sadd.s32 1, %s10
  $region7: #{basic_block_forward.6} parent=0 // loop_footer_branch
    %9 = sbr.rel target = $region3
  $region8: #{basic_block_forward.6} parent=0 // loop_exit
    _

// kernel: basic_block_forward.7
$region0: #{basic_block_forward.7}
  #allocation0 [shape = 'u32[]', space=smem, size = 0x4, offset = 0x4, fixed_abs, tag = 'smem constant byte address 0x4 - core index']
  #allocation1 [shape = 'u32[72,128]{1,0:T(1,128)}', space=vmem, size = 0x9000, scoped, tag = 'internal scratch']
  %s0 = inlined_call_operand.vmem [shape: f32[32,128], index: 0, kind: input, shape index: {}]
  %s1 = inlined_call_operand.vmem [shape: f32[1,128], index: 1, kind: input, shape index: {}]
  %s2 = inlined_call_operand.vmem [shape: f32[1,128], index: 2, kind: input, shape index: {}]
  %s3 = inlined_call_operand.vmem [shape: f32[32,128], index: 3, kind: output, shape index: {0}]
  %s4 = inlined_call_operand.vmem [shape: f32[32,128], index: 4, kind: output, shape index: {1}]
  %5 = xla_tuple %s3, %s4
  %s6 = sld [smem:[#allocation0]]
  $region53: #{basic_block_forward.7} parent=0
    _
  %s8 = ssub.s32 1, %s6
  %s9 = scalar_select 0, %s8, %s6
  loop: start=0, step=1, limit=6
  $region2: #{basic_block_forward.7} parent=0 // loop_pre_header
    _
  $region3: #{basic_block_forward.7} parent=0 // loop_header
    %s11 = sphi 0, %s15
    %p12 = scmp.ge.s32.totalorder %s11, 6
    %s21 = sphi 0, %s23
    %s24 = sphi 0, %s21
    %s25 = sphi 0, %s24
    %s41 = sphi 0, %s25
    %s45 = sphi 0, %s45
    %s47 = sphi 0, %s45
    %s48 = sphi 0, %s47
    %s62 = sphi 0, %s48
    %s66 = sphi 0, %s66
    %s68 = sphi 0, %s66
    %s69 = sphi 0, %s68
    %s83 = sphi 0, %s69
    %s89 = sphi 0, %s91
    %s92 = sphi 0, %s89
    %s93 = sphi 0, %s92
    %s109 = sphi 0, %s93
    %s115 = sphi 0, %s117
    %s118 = sphi 0, %s115
    %s119 = sphi 0, %s118
    %s135 = sphi 0, %s119
  $region4: #{basic_block_forward.7} parent=0 // loop_header_branch
    %14 = sbr.rel (%p12) target = $region8
  $region5: #{basic_block_forward.7} parent=0 // loop_body
    %s16 = ssub.s32 %s11, 1
    %s17 = ssub.s32 %s11, 2
    %s18 = sadd.s32 %s11, 1
    %s19 = ssub.s32 %s11, %s18
    %p20 = scmp.eq.s32.totalorder %s19, 0
    %s22 = sadd.s32 %s21, 1
    %s23 = scalar_select %p20, %s21, %s22
    %p26 = pneg %p20
    %p27 = scmp.eq.s32.totalorder %s11, 3
    %p28 = por %p26, %p27
    %p29 = scmp.ne.s32.totalorder %s21, %s24
    %p30 = scmp.eq.s32.totalorder %s11, 0
    %p31 = por %p29, %p30
    %p32 = scmp.ne.s32.totalorder %s21, %s24
    %p33 = scmp.eq.s32.totalorder %s16, 3
    %p34 = por %p32, %p33
    %p35 = scmp.ne.s32.totalorder %s24, %s25
    %p36 = scmp.eq.s32.totalorder %s16, 0
    %p37 = por %p35, %p36
    %p38 = scmp.ne.s32.totalorder %s24, %s25
    %p39 = scmp.eq.s32.totalorder %s17, 3
    %p40 = por %p38, %p39
    %p42 = scmp.ne.s32.totalorder %s25, %s41
    %p43 = scmp.eq.s32.totalorder %s17, 0
    %p44 = por %p42, %p43
    %s46 = sadd.s32 %s45, 1
    %p49 = scmp.eq.s32.totalorder %s11, 3
    %p50 = scmp.ne.s32.totalorder %s45, %s47
    %p51 = scmp.eq.s32.totalorder %s11, 0
    %p52 = por %p50, %p51
    %p53 = scmp.ne.s32.totalorder %s45, %s47
    %p54 = scmp.eq.s32.totalorder %s16, 3
    %p55 = por %p53, %p54
    %p56 = scmp.ne.s32.totalorder %s47, %s48
    %p57 = scmp.eq.s32.totalorder %s16, 0
    %p58 = por %p56, %p57
    %p59 = scmp.ne.s32.totalorder %s47, %s48
    %p60 = scmp.eq.s32.totalorder %s17, 3
    %p61 = por %p59, %p60
    %p63 = scmp.ne.s32.totalorder %s48, %s62
    %p64 = scmp.eq.s32.totalorder %s17, 0
    %p65 = por %p63, %p64
    %s67 = sadd.s32 %s66, 1
    %p70 = scmp.eq.s32.totalorder %s11, 3
    %p71 = scmp.ne.s32.totalorder %s66, %s68
    %p72 = scmp.eq.s32.totalorder %s11, 0
    %p73 = por %p71, %p72
    %p74 = scmp.ne.s32.totalorder %s66, %s68
    %p75 = scmp.eq.s32.totalorder %s16, 3
    %p76 = por %p74, %p75
    %p77 = scmp.ne.s32.totalorder %s68, %s69
    %p78 = scmp.eq.s32.totalorder %s16, 0
    %p79 = por %p77, %p78
    %p80 = scmp.ne.s32.totalorder %s68, %s69
    %p81 = scmp.eq.s32.totalorder %s17, 3
    %p82 = por %p80, %p81
    %p84 = scmp.ne.s32.totalorder %s69, %s83
    %p85 = scmp.eq.s32.totalorder %s17, 0
    %p86 = por %p84, %p85
    %s87 = ssub.s32 %s11, %s18
    %p88 = scmp.eq.s32.totalorder %s87, 0
    %s90 = sadd.s32 %s89, 1
    %s91 = scalar_select %p88, %s89, %s90
    %p94 = pneg %p88
    %p95 = scmp.eq.s32.totalorder %s11, 3
    %p96 = por %p94, %p95
    %p97 = scmp.ne.s32.totalorder %s89, %s92
    %p98 = scmp.eq.s32.totalorder %s11, 0
    %p99 = por %p97, %p98
    %p100 = scmp.ne.s32.totalorder %s89, %s92
    %p101 = scmp.eq.s32.totalorder %s16, 3
    %p102 = por %p100, %p101
    %p103 = scmp.ne.s32.totalorder %s92, %s93
    %p104 = scmp.eq.s32.totalorder %s16, 0
    %p105 = por %p103, %p104
    %p106 = scmp.ne.s32.totalorder %s92, %s93
    %p107 = scmp.eq.s32.totalorder %s17, 3
    %p108 = por %p106, %p107
    %p110 = scmp.ne.s32.totalorder %s93, %s109
    %p111 = scmp.eq.s32.totalorder %s17, 0
    %p112 = por %p110, %p111
    %s113 = ssub.s32 %s11, %s18
    %p114 = scmp.eq.s32.totalorder %s113, 0
    %s116 = sadd.s32 %s115, 1
    %s117 = scalar_select %p114, %s115, %s116
    %p120 = pneg %p114
    %p121 = scmp.eq.s32.totalorder %s11, 3
    %p122 = por %p120, %p121
    %p123 = scmp.ne.s32.totalorder %s115, %s118
    %p124 = scmp.eq.s32.totalorder %s11, 0
    %p125 = por %p123, %p124
    %p126 = scmp.ne.s32.totalorder %s115, %s118
    %p127 = scmp.eq.s32.totalorder %s16, 3
    %p128 = por %p126, %p127
    %p129 = scmp.ne.s32.totalorder %s118, %s119
    %p130 = scmp.eq.s32.totalorder %s16, 0
    %p131 = por %p129, %p130
    %p132 = scmp.ne.s32.totalorder %s118, %s119
    %p133 = scmp.eq.s32.totalorder %s17, 3
    %p134 = por %p132, %p133
    %p136 = scmp.ne.s32.totalorder %s119, %s135
    %p137 = scmp.eq.s32.totalorder %s17, 0
    %p138 = por %p136, %p137
    %p139 = scmp.le.s32.totalorder 1, %s11
    %p140 = scmp.lt.s32.totalorder %s11, 5
    %p141 = pnand %p139, %p140
    %p142 = pneg %p141
    // Predicated region
    $region9: #{basic_block_forward.7} parent=5 // pred_check
      _
    $region10: #{basic_block_forward.7} parent=5 // pred_check_branch
      %144 = sbr.rel (%p141) target = $region12
    $region11: #{basic_block_forward.7} parent=5 // pred_region
      %s145 = ssub.s32 %s11, 1
      // Predicated region
      $region13: #{basic_block_forward.7} parent=11 // pred_check
        %p146 = pneg %p58
      $region14: #{basic_block_forward.7} parent=11 // pred_check_branch
        %148 = sbr.rel (%p146) target = $region16
      $region15: #{basic_block_forward.7} parent=11 // pred_region
        _
      $region16: #{basic_block_forward.7} parent=11 // pred_fallthru
        _
      // Predicated region
      $region17: #{basic_block_forward.7} parent=11 // pred_check
        %p149 = pneg %p79
      $region18: #{basic_block_forward.7} parent=11 // pred_check_branch
        %151 = sbr.rel (%p149) target = $region20
      $region19: #{basic_block_forward.7} parent=11 // pred_region
        _
      $region20: #{basic_block_forward.7} parent=11 // pred_fallthru
        _
    $region12: #{basic_block_forward.7} parent=5 // pred_fallthru
      _
    %p152 = scmp.lt.s32.totalorder %s11, 4
    // Predicated region
    $region21: #{basic_block_forward.7} parent=5 // pred_check
      %p153 = pneg %p152
    $region22: #{basic_block_forward.7} parent=5 // pred_check_branch
      %155 = sbr.rel (%p153) target = $region24
    $region23: #{basic_block_forward.7} parent=5 // pred_region
      // Predicated region
      $region25: #{basic_block_forward.7} parent=23 // pred_check
        %p156 = pneg %p31
      $region26: #{basic_block_forward.7} parent=23 // pred_check_branch
        %158 = sbr.rel (%p156) target = $region28
      $region27: #{basic_block_forward.7} parent=23 // pred_region
        %p159 = scmp.lt.s32.totalorder %s11, 3
        %s160 = scalar_select %p159, %s11, 3
        %s161 = smul.addr %s160, 8
        %s162 = scalar_lea.vmem %s0, %s161
      $region28: #{basic_block_forward.7} parent=23 // pred_fallthru
        _
    $region24: #{basic_block_forward.7} parent=5 // pred_fallthru
      _
    %p163 = scmp.le.s32.totalorder 1, %s11
    %p164 = scmp.lt.s32.totalorder %s11, 5
    %p165 = pnand %p163, %p164
    %p166 = pneg %p165
    // Predicated region
    $region29: #{basic_block_forward.7} parent=5 // pred_check
      _
    $region30: #{basic_block_forward.7} parent=5 // pred_check_branch
      %168 = sbr.rel (%p165) target = $region32
    $region31: #{basic_block_forward.7} parent=5 // pred_region
      %s169 = ssub.s32 %s11, 1
      %p170 = scmp.lt.s32.totalorder %s16, 3
      %s171 = scalar_select %p170, %s16, 3
      %s172 = smul.addr %s171, 8
      %s173 = scalar_lea.vmem %s0, %s172
      %p174 = pneg %p37
      %p175 = pneg %p34
      %p176 = pneg %p58
      %p177 = pneg %p55
      %p178 = pneg %p79
      %p179 = pneg %p76
      %p180 = pneg %p105
      %p181 = pneg %p102
      %p182 = scmp.lt.s32.totalorder %s16, 3
      %s183 = scalar_select %p182, %s16, 3
      %s184 = smul.addr %s183, 8
      %s185 = scalar_lea.vmem %s3, %s184
      %p186 = pneg %p131
      %p187 = pneg %p128
      %p188 = scmp.lt.s32.totalorder %s16, 3
      %s189 = scalar_select %p188, %s16, 3
      %s190 = smul.addr %s189, 8
      %s191 = scalar_lea.vmem %s4, %s190
      %p192 = scmp.lt.s32.totalorder %s16, 3
      %s193 = scalar_select %p192, %s16, 3
      %s194 = smul.addr %s193, 8
      %s195 = scalar_lea.vmem %s0, %s194
      %p196 = scmp.lt.s32.totalorder %s16, 3
      %s197 = scalar_select %p196, %s16, 3
      %s198 = smul.addr %s197, 8
      %s199 = scalar_lea.vmem %s3, %s198
      %p200 = scmp.lt.s32.totalorder %s16, 3
      %s201 = scalar_select %p200, %s16, 3
      %s202 = smul.addr %s201, 8
      %s203 = scalar_lea.vmem %s4, %s202
      %v204 = vld [vmem:[%s195] sm:$0xff]
      %v205 = vld [vmem:[%s1] sm:$0x1]
      %v207 = vperm.slane %v205, 0
      %v209 = vmul.f32 %v204, %v207
      %v210 = vld [vmem:[%s2] sm:$0x1]
      %v212 = vperm.slane %v210, 0
      %v214 = vadd.f32 %v209, %v212
      %v215 = vmax.f32 %v214, 0.0
      %v216 = vmin.f32 %v215, 6.0
      %217 = vst [vmem:[%s199] sm:$0xff] %v216
      %v218 = vrot.slane %v216, 4
      %v219 = vmax.f32 %v216, %v218
      %v220 = vrot.slane %v219, 2
      %v221 = vmax.f32 %v219, %v220
      %v222 = vrot.slane %v221, 1
      %v223 = vmax.f32 %v221, %v222
      %v224 = vlaneseq
      %v225 = vshrl.u32 %v224, 7
      %vm226 = vcmp.eq.s32.totalorder %v225, 0
      %v227 = vsel %vm226, %v223, 0.0
      %228 = vst [vmem:[%s203] sm:$0xff] %v227
      %p229 = scmp.lt.s32.totalorder %s16, 3
      %s230 = scalar_select %p229, %s16, 3
      %s231 = smul.addr %s230, 8
      %s232 = scalar_lea.vmem %s3, %s231
      %p233 = scmp.lt.s32.totalorder %s16, 3
      %s234 = scalar_select %p233, %s16, 3
      %s235 = smul.addr %s234, 8
      %s236 = scalar_lea.vmem %s4, %s235
      // Predicated region
      $region33: #{basic_block_forward.7} parent=31 // pred_check
        %p237 = pneg %p102
      $region34: #{basic_block_forward.7} parent=31 // pred_check_branch
        %239 = sbr.rel (%p237) target = $region36
      $region35: #{basic_block_forward.7} parent=31 // pred_region
        _
      $region36: #{basic_block_forward.7} parent=31 // pred_fallthru
        _
      // Predicated region
      $region37: #{basic_block_forward.7} parent=31 // pred_check
        %p240 = pneg %p128
      $region38: #{basic_block_forward.7} parent=31 // pred_check_branch
        %242 = sbr.rel (%p240) target = $region40
      $region39: #{basic_block_forward.7} parent=31 // pred_region
        _
      $region40: #{basic_block_forward.7} parent=31 // pred_fallthru
        _
    $region32: #{basic_block_forward.7} parent=5 // pred_fallthru
      _
    %p243 = scmp.le.s32.totalorder 2, %s11
    // Predicated region
    $region41: #{basic_block_forward.7} parent=5 // pred_check
      %p244 = pneg %p243
    $region42: #{basic_block_forward.7} parent=5 // pred_check_branch
      %246 = sbr.rel (%p244) target = $region44
    $region43: #{basic_block_forward.7} parent=5 // pred_region
      %s247 = ssub.s32 %s11, 2
      // Predicated region
      $region45: #{basic_block_forward.7} parent=43 // pred_check
        %p248 = pneg %p108
      $region46: #{basic_block_forward.7} parent=43 // pred_check_branch
        %250 = sbr.rel (%p248) target = $region48
      $region47: #{basic_block_forward.7} parent=43 // pred_region
        %p251 = scmp.lt.s32.totalorder %s17, 3
        %s252 = scalar_select %p251, %s17, 3
        %s253 = smul.addr %s252, 8
        %s254 = scalar_lea.vmem %s3, %s253
      $region48: #{basic_block_forward.7} parent=43 // pred_fallthru
        _
      // Predicated region
      $region49: #{basic_block_forward.7} parent=43 // pred_check
        %p255 = pneg %p134
      $region50: #{basic_block_forward.7} parent=43 // pred_check_branch
        %257 = sbr.rel (%p255) target = $region52
      $region51: #{basic_block_forward.7} parent=43 // pred_region
        %p258 = scmp.lt.s32.totalorder %s17, 3
        %s259 = scalar_select %p258, %s17, 3
        %s260 = smul.addr %s259, 8
        %s261 = scalar_lea.vmem %s4, %s260
      $region52: #{basic_block_forward.7} parent=43 // pred_fallthru
        _
    $region44: #{basic_block_forward.7} parent=5 // pred_fallthru
      _
  $region6: #{basic_block_forward.7} parent=0 // loop_footer
    %s15 = sadd.s32 1, %s11
  $region7: #{basic_block_forward.7} parent=0 // loop_footer_branch
    %10 = sbr.rel target = $region3
  $region8: #{basic_block_forward.7} parent=0 // loop_exit
    _

// kernel: basic_block_forward.8
$region0: #{basic_block_forward.8}
  #allocation0 [shape = 'u32[]', space=smem, size = 0x4, offset = 0x4, fixed_abs, tag = 'smem constant byte address 0x4 - core index']
  #allocation1 [shape = 'u32[72,128]{1,0:T(1,128)}', space=vmem, size = 0x9000, scoped, tag = 'internal scratch']
  #allocation2 [shape = 'f32[1,1]{1,0:T(1,128)S(1)}', space=vmem, size = 0x200, scoped, tag = 'scoped memory for basic_block_forward.8']
  %s0 = inlined_call_operand.vmem [shape: f32[32,128], index: 0, kind: input, shape index: {}]
  %s1 = inlined_call_operand.<no memory space> [shape: f32[1,1], index: 1, kind: input, shape index: {}]
  %s2 = inlined_call_operand.vmem [shape: f32[32,128], index: 2, kind: output, shape index: {}]
  %s3 = sld [smem:[#allocation0]]
  $region41: #{basic_block_forward.8} parent=0
    _
  %s5 = ssub.s32 1, %s3
  %s6 = scalar_select 0, %s5, %s3
  %v7 = vstv %s1
  %8 = vst [vmem:[#allocation2] sm:$0x1] %v7
  loop: start=0, step=1, limit=6
  $region2: #{basic_block_forward.8} parent=0 // loop_pre_header
    _
  $region3: #{basic_block_forward.8} parent=0 // loop_header
    %s10 = sphi 0, %s14
    %p11 = scmp.ge.s32.totalorder %s10, 6
    %s20 = sphi 0, %s22
    %s23 = sphi 0, %s20
    %s24 = sphi 0, %s23
    %s40 = sphi 0, %s24
    %s44 = sphi 0, %s44
    %s46 = sphi 0, %s44
    %s47 = sphi 0, %s46
    %s61 = sphi 0, %s47
    %s67 = sphi 0, %s69
    %s70 = sphi 0, %s67
    %s71 = sphi 0, %s70
    %s87 = sphi 0, %s71
  $region4: #{basic_block_forward.8} parent=0 // loop_header_branch
    %13 = sbr.rel (%p11) target = $region8
  $region5: #{basic_block_forward.8} parent=0 // loop_body
    %s15 = ssub.s32 %s10, 1
    %s16 = ssub.s32 %s10, 2
    %s17 = sadd.s32 %s10, 1
    %s18 = ssub.s32 %s10, %s17
    %p19 = scmp.eq.s32.totalorder %s18, 0
    %s21 = sadd.s32 %s20, 1
    %s22 = scalar_select %p19, %s20, %s21
    %p25 = pneg %p19
    %p26 = scmp.eq.s32.totalorder %s10, 3
    %p27 = por %p25, %p26
    %p28 = scmp.ne.s32.totalorder %s20, %s23
    %p29 = scmp.eq.s32.totalorder %s10, 0
    %p30 = por %p28, %p29
    %p31 = scmp.ne.s32.totalorder %s20, %s23
    %p32 = scmp.eq.s32.totalorder %s15, 3
    %p33 = por %p31, %p32
    %p34 = scmp.ne.s32.totalorder %s23, %s24
    %p35 = scmp.eq.s32.totalorder %s15, 0
    %p36 = por %p34, %p35
    %p37 = scmp.ne.s32.totalorder %s23, %s24
    %p38 = scmp.eq.s32.totalorder %s16, 3
    %p39 = por %p37, %p38
    %p41 = scmp.ne.s32.totalorder %s24, %s40
    %p42 = scmp.eq.s32.totalorder %s16, 0
    %p43 = por %p41, %p42
    %s45 = sadd.s32 %s44, 1
    %p48 = scmp.eq.s32.totalorder %s10, 3
    %p49 = scmp.ne.s32.totalorder %s44, %s46
    %p50 = scmp.eq.s32.totalorder %s10, 0
    %p51 = por %p49, %p50
    %p52 = scmp.ne.s32.totalorder %s44, %s46
    %p53 = scmp.eq.s32.totalorder %s15, 3
    %p54 = por %p52, %p53
    %p55 = scmp.ne.s32.totalorder %s46, %s47
    %p56 = scmp.eq.s32.totalorder %s15, 0
    %p57 = por %p55, %p56
    %p58 = scmp.ne.s32.totalorder %s46, %s47
    %p59 = scmp.eq.s32.totalorder %s16, 3
    %p60 = por %p58, %p59
    %p62 = scmp.ne.s32.totalorder %s47, %s61
    %p63 = scmp.eq.s32.totalorder %s16, 0
    %p64 = por %p62, %p63
    %s65 = ssub.s32 %s10, %s17
    %p66 = scmp.eq.s32.totalorder %s65, 0
    %s68 = sadd.s32 %s67, 1
    %s69 = scalar_select %p66, %s67, %s68
    %p72 = pneg %p66
    %p73 = scmp.eq.s32.totalorder %s10, 3
    %p74 = por %p72, %p73
    %p75 = scmp.ne.s32.totalorder %s67, %s70
    %p76 = scmp.eq.s32.totalorder %s10, 0
    %p77 = por %p75, %p76
    %p78 = scmp.ne.s32.totalorder %s67, %s70
    %p79 = scmp.eq.s32.totalorder %s15, 3
    %p80 = por %p78, %p79
    %p81 = scmp.ne.s32.totalorder %s70, %s71
    %p82 = scmp.eq.s32.totalorder %s15, 0
    %p83 = por %p81, %p82
    %p84 = scmp.ne.s32.totalorder %s70, %s71
    %p85 = scmp.eq.s32.totalorder %s16, 3
    %p86 = por %p84, %p85
    %p88 = scmp.ne.s32.totalorder %s71, %s87
    %p89 = scmp.eq.s32.totalorder %s16, 0
    %p90 = por %p88, %p89
    %p91 = scmp.le.s32.totalorder 1, %s10
    %p92 = scmp.lt.s32.totalorder %s10, 5
    %p93 = pnand %p91, %p92
    %p94 = pneg %p93
    // Predicated region
    $region9: #{basic_block_forward.8} parent=5 // pred_check
      _
    $region10: #{basic_block_forward.8} parent=5 // pred_check_branch
      %96 = sbr.rel (%p93) target = $region12
    $region11: #{basic_block_forward.8} parent=5 // pred_region
      %s97 = ssub.s32 %s10, 1
      // Predicated region
      $region13: #{basic_block_forward.8} parent=11 // pred_check
        %p98 = pneg %p57
      $region14: #{basic_block_forward.8} parent=11 // pred_check_branch
        %100 = sbr.rel (%p98) target = $region16
      $region15: #{basic_block_forward.8} parent=11 // pred_region
        _
      $region16: #{basic_block_forward.8} parent=11 // pred_fallthru
        _
    $region12: #{basic_block_forward.8} parent=5 // pred_fallthru
      _
    %p101 = scmp.lt.s32.totalorder %s10, 4
    // Predicated region
    $region17: #{basic_block_forward.8} parent=5 // pred_check
      %p102 = pneg %p101
    $region18: #{basic_block_forward.8} parent=5 // pred_check_branch
      %104 = sbr.rel (%p102) target = $region20
    $region19: #{basic_block_forward.8} parent=5 // pred_region
      // Predicated region
      $region21: #{basic_block_forward.8} parent=19 // pred_check
        %p105 = pneg %p30
      $region22: #{basic_block_forward.8} parent=19 // pred_check_branch
        %107 = sbr.rel (%p105) target = $region24
      $region23: #{basic_block_forward.8} parent=19 // pred_region
        %p108 = scmp.lt.s32.totalorder %s10, 3
        %s109 = scalar_select %p108, %s10, 3
        %s110 = smul.addr %s109, 8
        %s111 = scalar_lea.vmem %s0, %s110
      $region24: #{basic_block_forward.8} parent=19 // pred_fallthru
        _
    $region20: #{basic_block_forward.8} parent=5 // pred_fallthru
      _
    %p112 = scmp.le.s32.totalorder 1, %s10
    %p113 = scmp.lt.s32.totalorder %s10, 5
    %p114 = pnand %p112, %p113
    %p115 = pneg %p114
    // Predicated region
    $region25: #{basic_block_forward.8} parent=5 // pred_check
      _
    $region26: #{basic_block_forward.8} parent=5 // pred_check_branch
      %117 = sbr.rel (%p114) target = $region28
    $region27: #{basic_block_forward.8} parent=5 // pred_region
      %s118 = ssub.s32 %s10, 1
      %p119 = scmp.lt.s32.totalorder %s15, 3
      %s120 = scalar_select %p119, %s15, 3
      %s121 = smul.addr %s120, 8
      %s122 = scalar_lea.vmem %s0, %s121
      %p123 = pneg %p36
      %p124 = pneg %p33
      %p125 = pneg %p57
      %p126 = pneg %p54
      %p127 = pneg %p83
      %p128 = pneg %p80
      %p129 = scmp.lt.s32.totalorder %s15, 3
      %s130 = scalar_select %p129, %s15, 3
      %s131 = smul.addr %s130, 8
      %s132 = scalar_lea.vmem %s2, %s131
      %p133 = scmp.lt.s32.totalorder %s15, 3
      %s134 = scalar_select %p133, %s15, 3
      %s135 = smul.addr %s134, 8
      %s136 = scalar_lea.vmem %s0, %s135
      %p137 = scmp.lt.s32.totalorder %s15, 3
      %s138 = scalar_select %p137, %s15, 3
      %s139 = smul.addr %s138, 8
      %s140 = scalar_lea.vmem %s2, %s139
      %v141 = vld [vmem:[#allocation2] sm:$0x1]
      %vm142 = vcmp.eq.f32.partialorder %v141, 0.0
      %v143 = vsel %vm142, 1.0, %v141
      %v144 = vrcp.pop %v143
      %v145 = vld [vmem:[%s136] sm:$0xff]
      %v146 = vmul.f32 %v144, 15.0
      %v148 = vperm.slane %v146, 0
      %149 = vset.pattern.permute.xlu0 0
      %150 = vperm.xlu0 %149, %v148
      %v151 = vpop.permute.xlu0 %150
      %v153 = vmul.f32 %v145, %v151
      %v154 = vround.ne.pseudo %v153
      %v155 = vmul.f32 %v154, 0.06666667
      %v157 = vperm.slane %v141, 0
      %158 = vset.pattern.permute.xlu0 0
      %159 = vperm.xlu0 %158, %v157
      %v160 = vpop.permute.xlu0 %159
      %v162 = vmul.f32 %v160, %v155
      %163 = vst [vmem:[%s140] sm:$0xff] %v162
      %p164 = scmp.lt.s32.totalorder %s15, 3
      %s165 = scalar_select %p164, %s15, 3
      %s166 = smul.addr %s165, 8
      %s167 = scalar_lea.vmem %s2, %s166
      // Predicated region
      $region29: #{basic_block_forward.8} parent=27 // pred_check
        %p168 = pneg %p80
      $region30: #{basic_block_forward.8} parent=27 // pred_check_branch
        %170 = sbr.rel (%p168) target = $region32
      $region31: #{basic_block_forward.8} parent=27 // pred_region
        _
      $region32: #{basic_block_forward.8} parent=27 // pred_fallthru
        _
    $region28: #{basic_block_forward.8} parent=5 // pred_fallthru
      _
    %p171 = scmp.le.s32.totalorder 2, %s10
    // Predicated region
    $region33: #{basic_block_forward.8} parent=5 // pred_check
      %p172 = pneg %p171
    $region34: #{basic_block_forward.8} parent=5 // pred_check_branch
      %174 = sbr.rel (%p172) target = $region36
    $region35: #{basic_block_forward.8} parent=5 // pred_region
      %s175 = ssub.s32 %s10, 2
      // Predicated region
      $region37: #{basic_block_forward.8} parent=35 // pred_check
        %p176 = pneg %p86
      $region38: #{basic_block_forward.8} parent=35 // pred_check_branch
        %178 = sbr.rel (%p176) target = $region40
      $region39: #{basic_block_forward.8} parent=35 // pred_region
        %p179 = scmp.lt.s32.totalorder %s16, 3
        %s180 = scalar_select %p179, %s16, 3
        %s181 = smul.addr %s180, 8
        %s182 = scalar_lea.vmem %s2, %s181
      $region40: #{basic_block_forward.8} parent=35 // pred_fallthru
        _
    $region36: #{basic_block_forward.8} parent=5 // pred_fallthru
      _
  $region6: #{basic_block_forward.8} parent=0 // loop_footer
    %s14 = sadd.s32 1, %s10
  $region7: #{basic_block_forward.8} parent=0 // loop_footer_branch
    %9 = sbr.rel target = $region3
  $region8: #{basic_block_forward.8} parent=0 // loop_exit
    _

// kernel: basic_block_forward.10
$region0: #{basic_block_forward.10}
  #allocation0 [shape = 'u32[]', space=smem, size = 0x4, offset = 0x4, fixed_abs, tag = 'smem constant byte address 0x4 - core index']
  #allocation1 [shape = 'u32[72,128]{1,0:T(1,128)}', space=vmem, size = 0x9000, scoped, tag = 'internal scratch']
  %s0 = inlined_call_operand.vmem [shape: f32[32,128], index: 0, kind: input, shape index: {}]
  %s1 = inlined_call_operand.vmem [shape: f32[1,128], index: 1, kind: input, shape index: {}]
  %s2 = inlined_call_operand.vmem [shape: f32[1,128], index: 2, kind: input, shape index: {}]
  %s3 = inlined_call_operand.vmem [shape: f32[32,128], index: 3, kind: input, shape index: {}]
  %s4 = inlined_call_operand.vmem [shape: f32[32,128], index: 4, kind: output, shape index: {0}]
  %s5 = inlined_call_operand.vmem [shape: f32[32,128], index: 5, kind: output, shape index: {1}]
  %6 = xla_tuple %s4, %s5
  %s7 = sld [smem:[#allocation0]]
  $region57: #{basic_block_forward.10} parent=0
    _
  %s9 = ssub.s32 1, %s7
  %s10 = scalar_select 0, %s9, %s7
  loop: start=0, step=1, limit=6
  $region2: #{basic_block_forward.10} parent=0 // loop_pre_header
    _
  $region3: #{basic_block_forward.10} parent=0 // loop_header
    %s12 = sphi 0, %s16
    %p13 = scmp.ge.s32.totalorder %s12, 6
    %s22 = sphi 0, %s24
    %s25 = sphi 0, %s22
    %s26 = sphi 0, %s25
    %s42 = sphi 0, %s26
    %s46 = sphi 0, %s46
    %s48 = sphi 0, %s46
    %s49 = sphi 0, %s48
    %s63 = sphi 0, %s49
    %s67 = sphi 0, %s67
    %s69 = sphi 0, %s67
    %s70 = sphi 0, %s69
    %s84 = sphi 0, %s70
    %s90 = sphi 0, %s92
    %s93 = sphi 0, %s90
    %s94 = sphi 0, %s93
    %s110 = sphi 0, %s94
    %s116 = sphi 0, %s118
    %s119 = sphi 0, %s116
    %s120 = sphi 0, %s119
    %s136 = sphi 0, %s120
    %s142 = sphi 0, %s144
    %s145 = sphi 0, %s142
    %s146 = sphi 0, %s145
    %s162 = sphi 0, %s146
  $region4: #{basic_block_forward.10} parent=0 // loop_header_branch
    %15 = sbr.rel (%p13) target = $region8
  $region5: #{basic_block_forward.10} parent=0 // loop_body
    %s17 = ssub.s32 %s12, 1
    %s18 = ssub.s32 %s12, 2
    %s19 = sadd.s32 %s12, 1
    %s20 = ssub.s32 %s12, %s19
    %p21 = scmp.eq.s32.totalorder %s20, 0
    %s23 = sadd.s32 %s22, 1
    %s24 = scalar_select %p21, %s22, %s23
    %p27 = pneg %p21
    %p28 = scmp.eq.s32.totalorder %s12, 3
    %p29 = por %p27, %p28
    %p30 = scmp.ne.s32.totalorder %s22, %s25
    %p31 = scmp.eq.s32.totalorder %s12, 0
    %p32 = por %p30, %p31
    %p33 = scmp.ne.s32.totalorder %s22, %s25
    %p34 = scmp.eq.s32.totalorder %s17, 3
    %p35 = por %p33, %p34
    %p36 = scmp.ne.s32.totalorder %s25, %s26
    %p37 = scmp.eq.s32.totalorder %s17, 0
    %p38 = por %p36, %p37
    %p39 = scmp.ne.s32.totalorder %s25, %s26
    %p40 = scmp.eq.s32.totalorder %s18, 3
    %p41 = por %p39, %p40
    %p43 = scmp.ne.s32.totalorder %s26, %s42
    %p44 = scmp.eq.s32.totalorder %s18, 0
    %p45 = por %p43, %p44
    %s47 = sadd.s32 %s46, 1
    %p50 = scmp.eq.s32.totalorder %s12, 3
    %p51 = scmp.ne.s32.totalorder %s46, %s48
    %p52 = scmp.eq.s32.totalorder %s12, 0
    %p53 = por %p51, %p52
    %p54 = scmp.ne.s32.totalorder %s46, %s48
    %p55 = scmp.eq.s32.totalorder %s17, 3
    %p56 = por %p54, %p55
    %p57 = scmp.ne.s32.totalorder %s48, %s49
    %p58 = scmp.eq.s32.totalorder %s17, 0
    %p59 = por %p57, %p58
    %p60 = scmp.ne.s32.totalorder %s48, %s49
    %p61 = scmp.eq.s32.totalorder %s18, 3
    %p62 = por %p60, %p61
    %p64 = scmp.ne.s32.totalorder %s49, %s63
    %p65 = scmp.eq.s32.totalorder %s18, 0
    %p66 = por %p64, %p65
    %s68 = sadd.s32 %s67, 1
    %p71 = scmp.eq.s32.totalorder %s12, 3
    %p72 = scmp.ne.s32.totalorder %s67, %s69
    %p73 = scmp.eq.s32.totalorder %s12, 0
    %p74 = por %p72, %p73
    %p75 = scmp.ne.s32.totalorder %s67, %s69
    %p76 = scmp.eq.s32.totalorder %s17, 3
    %p77 = por %p75, %p76
    %p78 = scmp.ne.s32.totalorder %s69, %s70
    %p79 = scmp.eq.s32.totalorder %s17, 0
    %p80 = por %p78, %p79
    %p81 = scmp.ne.s32.totalorder %s69, %s70
    %p82 = scmp.eq.s32.totalorder %s18, 3
    %p83 = por %p81, %p82
    %p85 = scmp.ne.s32.totalorder %s70, %s84
    %p86 = scmp.eq.s32.totalorder %s18, 0
    %p87 = por %p85, %p86
    %s88 = ssub.s32 %s12, %s19
    %p89 = scmp.eq.s32.totalorder %s88, 0
    %s91 = sadd.s32 %s90, 1
    %s92 = scalar_select %p89, %s90, %s91
    %p95 = pneg %p89
    %p96 = scmp.eq.s32.totalorder %s12, 3
    %p97 = por %p95, %p96
    %p98 = scmp.ne.s32.totalorder %s90, %s93
    %p99 = scmp.eq.s32.totalorder %s12, 0
    %p100 = por %p98, %p99
    %p101 = scmp.ne.s32.totalorder %s90, %s93
    %p102 = scmp.eq.s32.totalorder %s17, 3
    %p103 = por %p101, %p102
    %p104 = scmp.ne.s32.totalorder %s93, %s94
    %p105 = scmp.eq.s32.totalorder %s17, 0
    %p106 = por %p104, %p105
    %p107 = scmp.ne.s32.totalorder %s93, %s94
    %p108 = scmp.eq.s32.totalorder %s18, 3
    %p109 = por %p107, %p108
    %p111 = scmp.ne.s32.totalorder %s94, %s110
    %p112 = scmp.eq.s32.totalorder %s18, 0
    %p113 = por %p111, %p112
    %s114 = ssub.s32 %s12, %s19
    %p115 = scmp.eq.s32.totalorder %s114, 0
    %s117 = sadd.s32 %s116, 1
    %s118 = scalar_select %p115, %s116, %s117
    %p121 = pneg %p115
    %p122 = scmp.eq.s32.totalorder %s12, 3
    %p123 = por %p121, %p122
    %p124 = scmp.ne.s32.totalorder %s116, %s119
    %p125 = scmp.eq.s32.totalorder %s12, 0
    %p126 = por %p124, %p125
    %p127 = scmp.ne.s32.totalorder %s116, %s119
    %p128 = scmp.eq.s32.totalorder %s17, 3
    %p129 = por %p127, %p128
    %p130 = scmp.ne.s32.totalorder %s119, %s120
    %p131 = scmp.eq.s32.totalorder %s17, 0
    %p132 = por %p130, %p131
    %p133 = scmp.ne.s32.totalorder %s119, %s120
    %p134 = scmp.eq.s32.totalorder %s18, 3
    %p135 = por %p133, %p134
    %p137 = scmp.ne.s32.totalorder %s120, %s136
    %p138 = scmp.eq.s32.totalorder %s18, 0
    %p139 = por %p137, %p138
    %s140 = ssub.s32 %s12, %s19
    %p141 = scmp.eq.s32.totalorder %s140, 0
    %s143 = sadd.s32 %s142, 1
    %s144 = scalar_select %p141, %s142, %s143
    %p147 = pneg %p141
    %p148 = scmp.eq.s32.totalorder %s12, 3
    %p149 = por %p147, %p148
    %p150 = scmp.ne.s32.totalorder %s142, %s145
    %p151 = scmp.eq.s32.totalorder %s12, 0
    %p152 = por %p150, %p151
    %p153 = scmp.ne.s32.totalorder %s142, %s145
    %p154 = scmp.eq.s32.totalorder %s17, 3
    %p155 = por %p153, %p154
    %p156 = scmp.ne.s32.totalorder %s145, %s146
    %p157 = scmp.eq.s32.totalorder %s17, 0
    %p158 = por %p156, %p157
    %p159 = scmp.ne.s32.totalorder %s145, %s146
    %p160 = scmp.eq.s32.totalorder %s18, 3
    %p161 = por %p159, %p160
    %p163 = scmp.ne.s32.totalorder %s146, %s162
    %p164 = scmp.eq.s32.totalorder %s18, 0
    %p165 = por %p163, %p164
    %p166 = scmp.le.s32.totalorder 1, %s12
    %p167 = scmp.lt.s32.totalorder %s12, 5
    %p168 = pnand %p166, %p167
    %p169 = pneg %p168
    // Predicated region
    $region9: #{basic_block_forward.10} parent=5 // pred_check
      _
    $region10: #{basic_block_forward.10} parent=5 // pred_check_branch
      %171 = sbr.rel (%p168) target = $region12
    $region11: #{basic_block_forward.10} parent=5 // pred_region
      %s172 = ssub.s32 %s12, 1
      // Predicated region
      $region13: #{basic_block_forward.10} parent=11 // pred_check
        %p173 = pneg %p59
      $region14: #{basic_block_forward.10} parent=11 // pred_check_branch
        %175 = sbr.rel (%p173) target = $region16
      $region15: #{basic_block_forward.10} parent=11 // pred_region
        _
      $region16: #{basic_block_forward.10} parent=11 // pred_fallthru
        _
      // Predicated region
      $region17: #{basic_block_forward.10} parent=11 // pred_check
        %p176 = pneg %p80
      $region18: #{basic_block_forward.10} parent=11 // pred_check_branch
        %178 = sbr.rel (%p176) target = $region20
      $region19: #{basic_block_forward.10} parent=11 // pred_region
        _
      $region20: #{basic_block_forward.10} parent=11 // pred_fallthru
        _
    $region12: #{basic_block_forward.10} parent=5 // pred_fallthru
      _
    %p179 = scmp.lt.s32.totalorder %s12, 4
    // Predicated region
    $region21: #{basic_block_forward.10} parent=5 // pred_check
      %p180 = pneg %p179
    $region22: #{basic_block_forward.10} parent=5 // pred_check_branch
      %182 = sbr.rel (%p180) target = $region24
    $region23: #{basic_block_forward.10} parent=5 // pred_region
      // Predicated region
      $region25: #{basic_block_forward.10} parent=23 // pred_check
        %p183 = pneg %p32
      $region26: #{basic_block_forward.10} parent=23 // pred_check_branch
        %185 = sbr.rel (%p183) target = $region28
      $region27: #{basic_block_forward.10} parent=23 // pred_region
        %p186 = scmp.lt.s32.totalorder %s12, 3
        %s187 = scalar_select %p186, %s12, 3
        %s188 = smul.addr %s187, 8
        %s189 = scalar_lea.vmem %s0, %s188
      $region28: #{basic_block_forward.10} parent=23 // pred_fallthru
        _
      // Predicated region
      $region29: #{basic_block_forward.10} parent=23 // pred_check
        %p190 = pneg %p100
      $region30: #{basic_block_forward.10} parent=23 // pred_check_branch
        %192 = sbr.rel (%p190) target = $region32
      $region31: #{basic_block_forward.10} parent=23 // pred_region
        %p193 = scmp.lt.s32.totalorder %s12, 3
        %s194 = scalar_select %p193, %s12, 3
        %s195 = smul.addr %s194, 8
        %s196 = scalar_lea.vmem %s3, %s195
      $region32: #{basic_block_forward.10} parent=23 // pred_fallthru
        _
    $region24: #{basic_block_forward.10} parent=5 // pred_fallthru
      _
    %p197 = scmp.le.s32.totalorder 1, %s12
    %p198 = scmp.lt.s32.totalorder %s12, 5
    %p199 = pnand %p197, %p198
    %p200 = pneg %p199
    // Predicated region
    $region33: #{basic_block_forward.10} parent=5 // pred_check
      _
    $region34: #{basic_block_forward.10} parent=5 // pred_check_branch
      %202 = sbr.rel (%p199) target = $region36
    $region35: #{basic_block_forward.10} parent=5 // pred_region
      %s203 = ssub.s32 %s12, 1
      %p204 = scmp.lt.s32.totalorder %s17, 3
      %s205 = scalar_select %p204, %s17, 3
      %s206 = smul.addr %s205, 8
      %s207 = scalar_lea.vmem %s0, %s206
      %p208 = pneg %p38
      %p209 = pneg %p35
      %p210 = pneg %p59
      %p211 = pneg %p56
      %p212 = pneg %p80
      %p213 = pneg %p77
      %p214 = scmp.lt.s32.totalorder %s17, 3
      %s215 = scalar_select %p214, %s17, 3
      %s216 = smul.addr %s215, 8
      %s217 = scalar_lea.vmem %s3, %s216
      %p218 = pneg %p106
      %p219 = pneg %p103
      %p220 = pneg %p132
      %p221 = pneg %p129
      %p222 = scmp.lt.s32.totalorder %s17, 3
      %s223 = scalar_select %p222, %s17, 3
      %s224 = smul.addr %s223, 8
      %s225 = scalar_lea.vmem %s4, %s224
      %p226 = pneg %p158
      %p227 = pneg %p155
      %p228 = scmp.lt.s32.totalorder %s17, 3
      %s229 = scalar_select %p228, %s17, 3
      %s230 = smul.addr %s229, 8
      %s231 = scalar_lea.vmem %s5, %s230
      %p232 = scmp.lt.s32.totalorder %s17, 3
      %s233 = scalar_select %p232, %s17, 3
      %s234 = smul.addr %s233, 8
      %s235 = scalar_lea.vmem %s0, %s234
      %p236 = scmp.lt.s32.totalorder %s17, 3
      %s237 = scalar_select %p236, %s17, 3
      %s238 = smul.addr %s237, 8
      %s239 = scalar_lea.vmem %s3, %s238
      %p240 = scmp.lt.s32.totalorder %s17, 3
      %s241 = scalar_select %p240, %s17, 3
      %s242 = smul.addr %s241, 8
      %s243 = scalar_lea.vmem %s4, %s242
      %p244 = scmp.lt.s32.totalorder %s17, 3
      %s245 = scalar_select %p244, %s17, 3
      %s246 = smul.addr %s245, 8
      %s247 = scalar_lea.vmem %s5, %s246
      %v248 = vld [vmem:[%s235] sm:$0xff]
      %v249 = vld [vmem:[%s1] sm:$0x1]
      %v251 = vperm.slane %v249, 0
      %v253 = vmul.f32 %v248, %v251
      %v254 = vld [vmem:[%s2] sm:$0x1]
      %v256 = vperm.slane %v254, 0
      %v258 = vadd.f32 %v253, %v256
      %v259 = vld [vmem:[%s239] sm:$0xff]
      %v260 = vadd.f32 %v258, %v259
      %v261 = vmax.f32 %v260, 0.0
      %v262 = vmin.f32 %v261, 6.0
      %263 = vst [vmem:[%s243] sm:$0xff] %v262
      %v264 = vrot.slane %v262, 4
      %v265 = vmax.f32 %v262, %v264
      %v266 = vrot.slane %v265, 2
      %v267 = vmax.f32 %v265, %v266
      %v268 = vrot.slane %v267, 1
      %v269 = vmax.f32 %v267, %v268
      %v270 = vlaneseq
      %v271 = vshrl.u32 %v270, 7
      %vm272 = vcmp.eq.s32.totalorder %v271, 0
      %v273 = vsel %vm272, %v269, 0.0
      %274 = vst [vmem:[%s247] sm:$0xff] %v273
      %p275 = scmp.lt.s32.totalorder %s17, 3
      %s276 = scalar_select %p275, %s17, 3
      %s277 = smul.addr %s276, 8
      %s278 = scalar_lea.vmem %s4, %s277
      %p279 = scmp.lt.s32.totalorder %s17, 3
      %s280 = scalar_select %p279, %s17, 3
      %s281 = smul.addr %s280, 8
      %s282 = scalar_lea.vmem %s5, %s281
      // Predicated region
      $region37: #{basic_block_forward.10} parent=35 // pred_check
        %p283 = pneg %p129
      $region38: #{basic_block_forward.10} parent=35 // pred_check_branch
        %285 = sbr.rel (%p283) target = $region40
      $region39: #{basic_block_forward.10} parent=35 // pred_region
        _
      $region40: #{basic_block_forward.10} parent=35 // pred_fallthru
        _
      // Predicated region
      $region41: #{basic_block_forward.10} parent=35 // pred_check
        %p286 = pneg %p155
      $region42: #{basic_block_forward.10} parent=35 // pred_check_branch
        %288 = sbr.rel (%p286) target = $region44
      $region43: #{basic_block_forward.10} parent=35 // pred_region
        _
      $region44: #{basic_block_forward.10} parent=35 // pred_fallthru
        _
    $region36: #{basic_block_forward.10} parent=5 // pred_fallthru
      _
    %p289 = scmp.le.s32.totalorder 2, %s12
    // Predicated region
    $region45: #{basic_block_forward.10} parent=5 // pred_check
      %p290 = pneg %p289
    $region46: #{basic_block_forward.10} parent=5 // pred_check_branch
      %292 = sbr.rel (%p290) target = $region48
    $region47: #{basic_block_forward.10} parent=5 // pred_region
      %s293 = ssub.s32 %s12, 2
      // Predicated region
      $region49: #{basic_block_forward.10} parent=47 // pred_check
        %p294 = pneg %p135
      $region50: #{basic_block_forward.10} parent=47 // pred_check_branch
        %296 = sbr.rel (%p294) target = $region52
      $region51: #{basic_block_forward.10} parent=47 // pred_region
        %p297 = scmp.lt.s32.totalorder %s18, 3
        %s298 = scalar_select %p297, %s18, 3
        %s299 = smul.addr %s298, 8
        %s300 = scalar_lea.vmem %s4, %s299
      $region52: #{basic_block_forward.10} parent=47 // pred_fallthru
        _
      // Predicated region
      $region53: #{basic_block_forward.10} parent=47 // pred_check
        %p301 = pneg %p161
      $region54: #{basic_block_forward.10} parent=47 // pred_check_branch
        %303 = sbr.rel (%p301) target = $region56
      $region55: #{basic_block_forward.10} parent=47 // pred_region
        %p304 = scmp.lt.s32.totalorder %s18, 3
        %s305 = scalar_select %p304, %s18, 3
        %s306 = smul.addr %s305, 8
        %s307 = scalar_lea.vmem %s5, %s306
      $region56: #{basic_block_forward.10} parent=47 // pred_fallthru
        _
    $region48: #{basic_block_forward.10} parent=5 // pred_fallthru
      _
  $region6: #{basic_block_forward.10} parent=0 // loop_footer
    %s16 = sadd.s32 1, %s12
  $region7: #{basic_block_forward.10} parent=0 // loop_footer_branch
    %11 = sbr.rel target = $region3
  $region8: #{basic_block_forward.10} parent=0 // loop_exit
    _

</llo_original>
